<compile_context>
chip_gen: v6e
topology: v6e:2x2x1
jax: 0.10.0
libtpu: 0.0.40
codegen_flags: <defaults>
</compile_context>

<pallas_src>
import functools

import jax
import jax.numpy as jnp
from jax import lax
from jax.experimental import pallas as pl
from jax.experimental.pallas import tpu as pltpu


# ----------------------------------------------------------------------------
# Single fused kernel: feature extraction (per batch) + packed geo|tex MLP
# heads (per point tile) + backward_3D loss accumulation / finalization.
# ----------------------------------------------------------------------------
def _fused_kernel(inv_rows, inv_rgb,
                  lam_ref, cimg_ref, nimg_ref, wf_ref, bf_ref,
                  w1p_ref, w1f_ref, b1_ref, w2_ref, b2_ref,
                  pts_ref, d_ref, rgb_ref, nrm_ref,
                  out_ref, hfeat_sc, acc_sdf, acc_rgb, acc_nrm):
    b = pl.program_id(0)
    n = pl.program_id(1)
    Cf = wf_ref.shape[1]

    @pl.when((b == 0) & (n == 0))
    def _():
        acc_sdf[...] = jnp.zeros_like(acc_sdf)
        acc_rgb[...] = jnp.zeros_like(acc_rgb)
        acc_nrm[...] = jnp.zeros_like(acc_nrm)

    # ---- per-batch prologue: 1x1-conv feat extraction + global mean pool ----
    # The pooled features are constant over all point tiles of this batch item,
    # so their first-layer contribution (+ bias) is hoisted into VMEM scratch.
    @pl.when(n == 0)
    def _():
        xc = cimg_ref[0]                                              # (Cin, HW)
        xn = nimg_ref[0]
        fc = jnp.maximum(
            jnp.dot(wf_ref[0], xc, preferred_element_type=jnp.float32)
            + bf_ref[0], 0.0)                                         # (Cf, HW)
        fn = jnp.maximum(
            jnp.dot(wf_ref[1], xn, preferred_element_type=jnp.float32)
            + bf_ref[1], 0.0)
        mc = jnp.mean(fc, axis=1, keepdims=True)                      # (Cf, 1)
        mn = jnp.mean(fn, axis=1, keepdims=True)                      # (Cf, 1)
        hfeat_sc[...] = (
            jnp.dot(w1f_ref[:, :Cf], mc, preferred_element_type=jnp.float32)
            + jnp.dot(w1f_ref[:, Cf:], mn, preferred_element_type=jnp.float32)
            + b1_ref[...])                                            # (2*Dh, 1)

    # ---- per-tile packed geo|tex MLP + loss accumulation --------------------
    pts = pts_ref[0]                                                  # (3, TN)
    # pts part of the packed first layer: K=3 is cheaper as three broadcast
    # FMAs on the VPU than a padded MXU contraction.
    h = (w1p_ref[:, 0:1] * pts[0:1, :]
         + w1p_ref[:, 1:2] * pts[1:2, :]
         + w1p_ref[:, 2:3] * pts[2:3, :]
         + hfeat_sc[...])                                             # (2*Dh, TN)
    h = jnp.maximum(h, 0.0)
    out = jnp.dot(w2_ref[...], h, preferred_element_type=jnp.float32) + b2_ref[...]

    pred_sdf = out[0:1, :]                                            # geo head
    pred_nrm = out[1:4, :]
    pred_rgb = out[4:7, :]                                            # tex head

    d = d_ref[0]                                                      # (1, TN)
    rgb = rgb_ref[0]                                                  # (3, TN)
    nrm = nrm_ref[0]                                                  # (3, TN)

    acc_sdf[...] += jnp.sum(jnp.abs(pred_sdf - d), keepdims=True)
    acc_rgb[...] += jnp.sum(jnp.abs(pred_rgb - rgb), keepdims=True)

    # PyTorch F.cosine_similarity: x.y / (max(||x||,eps)*max(||y||,eps)), eps=1e-8
    w12 = jnp.sum(pred_nrm * nrm, axis=0, keepdims=True)              # (1, TN)
    w11 = jnp.sum(pred_nrm * pred_nrm, axis=0, keepdims=True)
    w22 = jnp.sum(nrm * nrm, axis=0, keepdims=True)
    cos = w12 * lax.rsqrt(jnp.maximum(w11, 1e-16) * jnp.maximum(w22, 1e-16))
    acc_nrm[...] += jnp.sum(jnp.abs(1.0 - cos), keepdims=True)

    @pl.when((b == pl.num_programs(0) - 1) & (n == pl.num_programs(1) - 1))
    def _():
        reco = acc_sdf[...] * inv_rows                                # (1,1) means
        rgbl = acc_rgb[...] * inv_rgb
        nrml = acc_nrm[...] * inv_rows
        total = reco * lam_ref[0] + rgbl * lam_ref[1] + nrml * lam_ref[2]
        out_ref[:, 0:1] = total
        out_ref[:, 1:2] = reco
        out_ref[:, 2:3] = rgbl
        out_ref[:, 3:4] = nrml


def fused_recon_call(params, lam, cimg, nimg, pts_t, d_t, rgb_t, nrm_t, *, tn):
    B, Cin, HW = cimg.shape
    Cf = params["w_feat"].shape[1]
    two_dh = params["w1p"].shape[0]
    N = pts_t.shape[2]
    rows = B * N
    kern = functools.partial(_fused_kernel, 1.0 / rows, 1.0 / (rows * 3))
    return pl.pallas_call(
        kern,
        out_shape=jax.ShapeDtypeStruct((1, 4), jnp.float32),
        grid=(B, N // tn),
        in_specs=[
            pl.BlockSpec(memory_space=pltpu.MemorySpace.SMEM),             # lambdas
            pl.BlockSpec((1, Cin, HW), lambda b_, n_: (b_, 0, 0)),          # color img
            pl.BlockSpec((1, Cin, HW), lambda b_, n_: (b_, 0, 0)),          # normal img
            pl.BlockSpec((2, Cf, Cin), lambda b_, n_: (0, 0, 0)),           # feat W
            pl.BlockSpec((2, Cf, 1), lambda b_, n_: (0, 0, 0)),             # feat b
            pl.BlockSpec((two_dh, 3), lambda b_, n_: (0, 0)),               # W1 (pts rows)
            pl.BlockSpec((two_dh, 2 * Cf), lambda b_, n_: (0, 0)),          # W1 (feat rows)
            pl.BlockSpec((two_dh, 1), lambda b_, n_: (0, 0)),               # b1
            pl.BlockSpec((8, two_dh), lambda b_, n_: (0, 0)),               # packed W2
            pl.BlockSpec((8, 1), lambda b_, n_: (0, 0)),                    # b2
            pl.BlockSpec((1, 3, tn), lambda b_, n_: (b_, 0, n_)),           # pts (B,3,N)
            pl.BlockSpec((1, 1, tn), lambda b_, n_: (b_, 0, n_)),           # d   (B,1,N)
            pl.BlockSpec((1, 3, tn), lambda b_, n_: (b_, 0, n_)),           # rgb (B,3,N)
            pl.BlockSpec((1, 3, tn), lambda b_, n_: (b_, 0, n_)),           # nrm (B,3,N)
        ],
        out_specs=pl.BlockSpec((1, 4), lambda b_, n_: (0, 0)),
        scratch_shapes=[pltpu.VMEM((two_dh, 1), jnp.float32),
                        pltpu.VMEM((1, 1), jnp.float32),
                        pltpu.VMEM((1, 1), jnp.float32),
                        pltpu.VMEM((1, 1), jnp.float32)],
        compiler_params=pltpu.CompilerParams(
            dimension_semantics=("arbitrary", "arbitrary")),
    )(lam, cimg, nimg, params["w_feat"], params["b_feat"],
      params["w1p"], params["w1f"], params["b1"], params["w2"], params["b2"],
      pts_t, d_t, rgb_t, nrm_t)


# ----------------------------------------------------------------------------
# Jitted forward wrapper: layout plumbing only (free reshapes + tiny transposes)
# ----------------------------------------------------------------------------
@functools.partial(jax.jit, static_argnames=("tn",))
def fused_forward(params, lam, rgb_img, nrm_img, pts, d, rgb, nrm, *, tn):
    B, Cin, H, W = rgb_img.shape
    cimg = rgb_img.reshape(B, Cin, H * W)        # NCHW -> (B, Cin, HW): free
    nimg = nrm_img.reshape(B, Cin, H * W)
    # Channel-first point layout so the big point axis lands on the lane axis
    # inside the kernel (lane-dense blocks, no (8,128) tile padding blow-up).
    pts_t = jnp.swapaxes(pts, 1, 2)              # (B, 3, N)
    rgb_t = jnp.swapaxes(rgb, 1, 2)              # (B, 3, N)
    nrm_t = jnp.swapaxes(nrm, 1, 2)              # (B, 3, N)
    d_t = d.reshape(d.shape[0], 1, d.shape[1])   # (B, N, 1) -> (B, 1, N): free
    losses = fused_recon_call(params, lam, cimg, nimg, pts_t, d_t, rgb_t, nrm_t,
                              tn=tn)
    return losses[0]                             # (4,): [total, reco, rgb, nrm]


def _pick_tile(n, max_tile=512):
    """Point-tile size: full N if small, else a multiple-of-128 divisor of N."""
    if n <= max_tile:
        return int(n)
    t = (max_tile // 128) * 128
    while t >= 128:
        if n % t == 0:
            return int(t)
        t -= 128
    return int(n)  # TODO(synk): ragged N would need a masked tail tile


# ----------------------------------------------------------------------------
# ReconModel wrapper (parameters + forward)
# ----------------------------------------------------------------------------
class ReconModel:
    def __init__(self, cfg, key):
        if cfg["views"] not in (2, 4):
            raise ValueError("Invalid number of views. Choose 2 or 4.")
        self.cfg = cfg
        self.log_dict = {}
        self._init_log_dict()

        Cin = cfg["views"] * 3
        Cf = cfg["feat_dim"]
        Dh = cfg["hidden_dim"]
        Din = 3 + 2 * Cf

        keys = jax.random.split(key, 6)
        s = lambda k, shape, fan: (jax.random.normal(k, shape, jnp.float32)
                                   / jnp.sqrt(float(fan)))
        # Synthetic stand-ins for FeatureExtractor / GeoModel / TexModel weights.
        wc = s(keys[0], (Cf, Cin), Cin)
        wn = s(keys[1], (Cf, Cin), Cin)
        g_w1 = s(keys[2], (Din, Dh), Din)
        t_w1 = s(keys[3], (Din, Dh), Din)
        g_w2 = s(keys[4], (Dh, 4), Dh)
        t_w2 = s(keys[5], (Dh, 3), Dh)

        # Pack geo|tex heads (stored pre-transposed, hidden-on-sublane layout):
        # first layer rows 0:Dh = geo, Dh:2Dh = tex; second layer (8, 2*Dh) with
        # rows [sdf, nrm(3), rgb(3), pad] block-diagonal over the two heads.
        w2t = jnp.zeros((8, 2 * Dh), jnp.float32)
        w2t = w2t.at[0:4, :Dh].set(g_w2.T)
        w2t = w2t.at[4:7, Dh:].set(t_w2.T)

        self.params = {
            "w_feat": jnp.stack([wc, wn], axis=0),                      # (2, Cf, Cin)
            "b_feat": jnp.zeros((2, Cf, 1), jnp.float32),
            "w1p": jnp.concatenate([g_w1[:3].T, t_w1[:3].T], axis=0),   # (2*Dh, 3)
            "w1f": jnp.concatenate([g_w1[3:].T, t_w1[3:].T], axis=0),   # (2*Dh, 2*Cf)
            "b1": jnp.zeros((2 * Dh, 1), jnp.float32),
            "w2": w2t,                                                  # (8, 2*Dh)
            "b2": jnp.zeros((8, 1), jnp.float32),
        }
        self.lam = jnp.asarray(
            [cfg["lambda_sdf"], cfg["lambda_rgb"], cfg["lambda_nrm"]], jnp.float32)

    def _init_log_dict(self):
        self.log_dict["Loss_3D/reco_loss"] = 0.0
        self.log_dict["Loss_3D/rgb_loss"] = 0.0
        self.log_dict["Loss_3D/nrm_loss"] = 0.0
        self.log_dict["Loss_3D/total_loss"] = 0.0
        self.log_dict["total_iter_count"] = 0

    def forward(self, input_data):
        pts = input_data["pts"]
        tn = _pick_tile(pts.shape[1])
        losses_dev = fused_forward(
            self.params, self.lam,
            input_data["rgb_img"], input_data["nrm_img"],
            pts, input_data["d"], input_data["rgb"], input_data["nrm"],
            tn=tn)
        # single host sync per step for logging
        total, reco, rgbl, nrml = [float(v) for v in jax.device_get(losses_dev)]
        self.log_dict["Loss_3D/reco_loss"] += reco
        self.log_dict["Loss_3D/rgb_loss"] += rgbl
        self.log_dict["Loss_3D/nrm_loss"] += nrml
        self.log_dict["Loss_3D/total_loss"] += total
        self.log_dict["total_iter_count"] += 1
        return losses_dev[0:1]     # matches loss_3D.unsqueeze(0) -> shape (1,)


# ----------------------------------------------------------------------------
# Driver
# ----------------------------------------------------------------------------
if __name__ == "__main__":
    cfg = {
        "views": 4,
        "feat_dim": 32,
        "hidden_dim": 64,
        "lambda_sdf": 1.0,
        "lambda_rgb": 0.5,
        "lambda_nrm": 0.1,
    }

    key = jax.random.PRNGKey(0)
    k_model, k_rgbimg, k_nrmimg, k_pts, k_d, k_rgb, k_nrm = jax.random.split(key, 7)

    B, H, W, N = 2, 16, 16, 128
    Cin = cfg["views"] * 3  # 4 views x RGB channels, NCHW like the PyTorch module

    raw_nrm = jax.random.normal(k_nrm, (B, N, 3), jnp.float32)
    input_data = {
        "rgb_img": jax.random.normal(k_rgbimg, (B, Cin, H, W), jnp.float32),
        "nrm_img": jax.random.normal(k_nrmimg, (B, Cin, H, W), jnp.float32),
        "pts": jax.random.normal(k_pts, (B, N, 3), jnp.float32),
        "d": jax.random.normal(k_d, (B, N, 1), jnp.float32) * 0.1,
        "rgb": jax.random.uniform(k_rgb, (B, N, 3), jnp.float32),
        "nrm": raw_nrm / jnp.linalg.norm(raw_nrm, axis=-1, keepdims=True),
    }

    model = ReconModel(cfg, k_model)
    loss = model.forward(input_data)
    loss = jax.block_until_ready(loss)

    assert loss.shape == (1,) and jnp.isfinite(loss).all()
    print("KERNEL_OK")
</pallas_src>

<mosaic_0001>
module attributes {stable_mosaic.version = 11 : i64} {
  func.func @_fused_kernel(%arg0: i32, %arg1: i32, %arg2: memref<3xf32, #tpu.memory_space<smem>>, %arg3: memref<1x12x256xf32, #tpu.memory_space<vmem>>, %arg4: memref<1x12x256xf32, #tpu.memory_space<vmem>>, %arg5: memref<2x32x12xf32, #tpu.memory_space<vmem>>, %arg6: memref<2x32x1xf32, #tpu.memory_space<vmem>>, %arg7: memref<128x3xf32, #tpu.memory_space<vmem>>, %arg8: memref<128x64xf32, #tpu.memory_space<vmem>>, %arg9: memref<128x1xf32, #tpu.memory_space<vmem>>, %arg10: memref<8x128xf32, #tpu.memory_space<vmem>>, %arg11: memref<8x1xf32, #tpu.memory_space<vmem>>, %arg12: memref<1x3x128xf32, #tpu.memory_space<vmem>>, %arg13: memref<1x1x128xf32, #tpu.memory_space<vmem>>, %arg14: memref<1x3x128xf32, #tpu.memory_space<vmem>>, %arg15: memref<1x3x128xf32, #tpu.memory_space<vmem>>, %arg16: memref<1x4xf32, #tpu.memory_space<vmem>>, %arg17: memref<128x1xf32, #tpu.memory_space<vmem>>, %arg18: memref<1x1xf32, #tpu.memory_space<vmem>>, %arg19: memref<1x1xf32, #tpu.memory_space<vmem>>, %arg20: memref<1x1xf32, #tpu.memory_space<vmem>>) attributes {dimension_semantics = [#tpu.dimension_semantics<arbitrary>, #tpu.dimension_semantics<arbitrary>], iteration_bounds = array<i64: 2, 1>, scalar_prefetch = 0 : i64, scratch_operands = 4 : i64, tpu.core_type = #tpu.core_type<tc>, window_params = [{transform_indices = @transform_0, window_bounds = array<i64: 3>}, {transform_indices = @transform_1, window_bounds = array<i64: 1, 12, 256>}, {transform_indices = @transform_2, window_bounds = array<i64: 1, 12, 256>}, {pipeline_mode = #tpu.pipeline_mode<synchronous>, transform_indices = @transform_3, window_bounds = array<i64: 2, 32, 12>}, {pipeline_mode = #tpu.pipeline_mode<synchronous>, transform_indices = @transform_4, window_bounds = array<i64: 2, 32, 1>}, {pipeline_mode = #tpu.pipeline_mode<synchronous>, transform_indices = @transform_5, window_bounds = array<i64: 128, 3>}, {pipeline_mode = #tpu.pipeline_mode<synchronous>, transform_indices = @transform_6, window_bounds = array<i64: 128, 64>}, {pipeline_mode = #tpu.pipeline_mode<synchronous>, transform_indices = @transform_7, window_bounds = array<i64: 128, 1>}, {pipeline_mode = #tpu.pipeline_mode<synchronous>, transform_indices = @transform_8, window_bounds = array<i64: 8, 128>}, {pipeline_mode = #tpu.pipeline_mode<synchronous>, transform_indices = @transform_9, window_bounds = array<i64: 8, 1>}, {transform_indices = @transform_10, window_bounds = array<i64: 1, 3, 128>}, {transform_indices = @transform_11, window_bounds = array<i64: 1, 1, 128>}, {transform_indices = @transform_12, window_bounds = array<i64: 1, 3, 128>}, {transform_indices = @transform_13, window_bounds = array<i64: 1, 3, 128>}, {pipeline_mode = #tpu.pipeline_mode<synchronous>, transform_indices = @transform_14, window_bounds = array<i64: 1, 4>}]} {
    %c0_i32 = arith.constant 0 : i32
    %0 = arith.cmpi eq, %arg0, %c0_i32 : i32
    %c0_i32_0 = arith.constant 0 : i32
    %1 = arith.cmpi eq, %arg1, %c0_i32_0 : i32
    %2 = arith.andi %0, %1 : i1
    %3 = arith.extui %2 : i1 to i32
    %c0_i32_1 = arith.constant 0 : i32
    %4 = arith.cmpi ne, %3, %c0_i32_1 : i32
    scf.if %4 {
      %cst_49 = arith.constant 0.000000e+00 : f32
      %98 = vector.broadcast %cst_49 : f32 to vector<1x1xf32>
      %c0_50 = arith.constant 0 : index
      %c0_51 = arith.constant 0 : index
      %99 = vector.load %arg18[%c0_50, %c0_51] : memref<1x1xf32, #tpu.memory_space<vmem>>, vector<1x1xf32>
      tpu.vector_store %arg18[%c0_50, %c0_51], %98 {strides = array<i32>} : memref<1x1xf32, #tpu.memory_space<vmem>>, vector<1x1xf32>,
      %cst_52 = arith.constant 0.000000e+00 : f32
      %100 = vector.broadcast %cst_52 : f32 to vector<1x1xf32>
      %c0_53 = arith.constant 0 : index
      %c0_54 = arith.constant 0 : index
      %101 = vector.load %arg19[%c0_53, %c0_54] : memref<1x1xf32, #tpu.memory_space<vmem>>, vector<1x1xf32>
      tpu.vector_store %arg19[%c0_53, %c0_54], %100 {strides = array<i32>} : memref<1x1xf32, #tpu.memory_space<vmem>>, vector<1x1xf32>,
      %cst_55 = arith.constant 0.000000e+00 : f32
      %102 = vector.broadcast %cst_55 : f32 to vector<1x1xf32>
      %c0_56 = arith.constant 0 : index
      %c0_57 = arith.constant 0 : index
      %103 = vector.load %arg20[%c0_56, %c0_57] : memref<1x1xf32, #tpu.memory_space<vmem>>, vector<1x1xf32>
      tpu.vector_store %arg20[%c0_56, %c0_57], %102 {strides = array<i32>} : memref<1x1xf32, #tpu.memory_space<vmem>>, vector<1x1xf32>,
    } else {
    }
    %c0_i32_2 = arith.constant 0 : i32
    %5 = arith.cmpi eq, %arg1, %c0_i32_2 : i32
    %6 = arith.extui %5 : i1 to i32
    %c0_i32_3 = arith.constant 0 : i32
    %7 = arith.cmpi ne, %6, %c0_i32_3 : i32
    scf.if %7 {
      %c0_49 = arith.constant 0 : index
      %c0_50 = arith.constant 0 : index
      %c0_51 = arith.constant 0 : index
      %98 = vector.load %arg3[%c0_49, %c0_50, %c0_51] : memref<1x12x256xf32, #tpu.memory_space<vmem>>, vector<1x12x256xf32>
      %99 = vector.shape_cast %98 : vector<1x12x256xf32> to vector<12x256xf32>
      %c0_52 = arith.constant 0 : index
      %c0_53 = arith.constant 0 : index
      %c0_54 = arith.constant 0 : index
      %100 = vector.load %arg4[%c0_52, %c0_53, %c0_54] : memref<1x12x256xf32, #tpu.memory_space<vmem>>, vector<1x12x256xf32>
      %101 = vector.shape_cast %100 : vector<1x12x256xf32> to vector<12x256xf32>
      %c0_55 = arith.constant 0 : index
      %c0_56 = arith.constant 0 : index
      %c0_57 = arith.constant 0 : index
      %102 = vector.load %arg5[%c0_55, %c0_56, %c0_57] : memref<2x32x12xf32, #tpu.memory_space<vmem>>, vector<1x32x12xf32>
      %103 = vector.shape_cast %102 : vector<1x32x12xf32> to vector<32x12xf32>
      %cst_58 = arith.constant dense<0.000000e+00> : vector<32x256xf32>
      %104 = tpu.matmul %103, %99, %cst_58 {dimension_numbers = #tpu.dot_dimension_numbers<[1], [0], [0], [1], [0, 0, 1, 1], [], []>} : vector<32x12xf32>, vector<12x256xf32>, vector<32x256xf32> -> vector<32x256xf32>
      %c0_59 = arith.constant 0 : index
      %c0_60 = arith.constant 0 : index
      %c0_61 = arith.constant 0 : index
      %105 = vector.load %arg6[%c0_59, %c0_60, %c0_61] : memref<2x32x1xf32, #tpu.memory_space<vmem>>, vector<1x32x1xf32>
      %106 = vector.shape_cast %105 : vector<1x32x1xf32> to vector<32x1xf32>
      %107 = vector.broadcast %106 : vector<32x1xf32> to vector<32x256xf32>
      %108 = arith.addf %104, %107 : vector<32x256xf32>
      %cst_62 = arith.constant 0.000000e+00 : f32
      %109 = vector.broadcast %cst_62 : f32 to vector<32x256xf32>
      %110 = arith.maximumf %108, %109 : vector<32x256xf32>
      %c1_63 = arith.constant 1 : index
      %c0_64 = arith.constant 0 : index
      %c0_65 = arith.constant 0 : index
      %111 = vector.load %arg5[%c1_63, %c0_64, %c0_65] : memref<2x32x12xf32, #tpu.memory_space<vmem>>, vector<1x32x12xf32>
      %112 = vector.shape_cast %111 : vector<1x32x12xf32> to vector<32x12xf32>
      %cst_66 = arith.constant dense<0.000000e+00> : vector<32x256xf32>
      %113 = tpu.matmul %112, %101, %cst_66 {dimension_numbers = #tpu.dot_dimension_numbers<[1], [0], [0], [1], [0, 0, 1, 1], [], []>} : vector<32x12xf32>, vector<12x256xf32>, vector<32x256xf32> -> vector<32x256xf32>
      %c1_67 = arith.constant 1 : index
      %c0_68 = arith.constant 0 : index
      %c0_69 = arith.constant 0 : index
      %114 = vector.load %arg6[%c1_67, %c0_68, %c0_69] : memref<2x32x1xf32, #tpu.memory_space<vmem>>, vector<1x32x1xf32>
      %115 = vector.shape_cast %114 : vector<1x32x1xf32> to vector<32x1xf32>
      %116 = vector.broadcast %115 : vector<32x1xf32> to vector<32x256xf32>
      %117 = arith.addf %113, %116 : vector<32x256xf32>
      %cst_70 = arith.constant 0.000000e+00 : f32
      %118 = vector.broadcast %cst_70 : f32 to vector<32x256xf32>
      %119 = arith.maximumf %117, %118 : vector<32x256xf32>
      %cst_71 = arith.constant dense<0.000000e+00> : vector<32xf32>
      %120 = vector.multi_reduction <add>, %110, %cst_71 [1] : vector<32x256xf32> to vector<32xf32>
      %121 = vector.shape_cast %120 : vector<32xf32> to vector<32x1xf32>
      %cst_72 = arith.constant 2.560000e+02 : f32
      %122 = vector.broadcast %cst_72 : f32 to vector<32x1xf32>
      %123 = arith.divf %121, %122 : vector<32x1xf32>
      %cst_73 = arith.constant dense<0.000000e+00> : vector<32xf32>
      %124 = vector.multi_reduction <add>, %119, %cst_73 [1] : vector<32x256xf32> to vector<32xf32>
      %125 = vector.shape_cast %124 : vector<32xf32> to vector<32x1xf32>
      %cst_74 = arith.constant 2.560000e+02 : f32
      %126 = vector.broadcast %cst_74 : f32 to vector<32x1xf32>
      %127 = arith.divf %125, %126 : vector<32x1xf32>
      %c0_75 = arith.constant 0 : index
      %c0_76 = arith.constant 0 : index
      %128 = vector.load %arg8[%c0_75, %c0_76] : memref<128x64xf32, #tpu.memory_space<vmem>>, vector<128x32xf32>
      %cst_77 = arith.constant dense<0.000000e+00> : vector<128x1xf32>
      %129 = tpu.matmul %128, %123, %cst_77 {dimension_numbers = #tpu.dot_dimension_numbers<[1], [0], [0], [1], [0, 0, 1, 1], [], []>} : vector<128x32xf32>, vector<32x1xf32>, vector<128x1xf32> -> vector<128x1xf32>
      %c0_78 = arith.constant 0 : index
      %c32 = arith.constant 32 : index
      %130 = vector.load %arg8[%c0_78, %c32] : memref<128x64xf32, #tpu.memory_space<vmem>>, vector<128x32xf32>
      %cst_79 = arith.constant dense<0.000000e+00> : vector<128x1xf32>
      %131 = tpu.matmul %130, %127, %cst_79 {dimension_numbers = #tpu.dot_dimension_numbers<[1], [0], [0], [1], [0, 0, 1, 1], [], []>} : vector<128x32xf32>, vector<32x1xf32>, vector<128x1xf32> -> vector<128x1xf32>
      %132 = arith.addf %129, %131 : vector<128x1xf32>
      %c0_80 = arith.constant 0 : index
      %c0_81 = arith.constant 0 : index
      %133 = vector.load %arg9[%c0_80, %c0_81] : memref<128x1xf32, #tpu.memory_space<vmem>>, vector<128x1xf32>
      %134 = arith.addf %132, %133 : vector<128x1xf32>
      %c0_82 = arith.constant 0 : index
      %c0_83 = arith.constant 0 : index
      %135 = vector.load %arg17[%c0_82, %c0_83] : memref<128x1xf32, #tpu.memory_space<vmem>>, vector<128x1xf32>
      tpu.vector_store %arg17[%c0_82, %c0_83], %134 {strides = array<i32>} : memref<128x1xf32, #tpu.memory_space<vmem>>, vector<128x1xf32>,
    } else {
    }
    %c0 = arith.constant 0 : index
    %c0_4 = arith.constant 0 : index
    %c0_5 = arith.constant 0 : index
    %8 = vector.load %arg12[%c0, %c0_4, %c0_5] : memref<1x3x128xf32, #tpu.memory_space<vmem>>, vector<1x3x128xf32>
    %9 = vector.shape_cast %8 : vector<1x3x128xf32> to vector<3x128xf32>
    %c0_6 = arith.constant 0 : index
    %c0_7 = arith.constant 0 : index
    %10 = vector.load %arg7[%c0_6, %c0_7] : memref<128x3xf32, #tpu.memory_space<vmem>>, vector<128x1xf32>
    %11 = vector.extract_strided_slice %9 {offsets = [0, 0], sizes = [1, 128], strides = [1, 1]} : vector<3x128xf32> to vector<1x128xf32>
    %12 = vector.broadcast %10 : vector<128x1xf32> to vector<128x128xf32>
    %13 = vector.broadcast %11 : vector<1x128xf32> to vector<128x128xf32>
    %14 = arith.mulf %12, %13 : vector<128x128xf32>
    %c0_8 = arith.constant 0 : index
    %c1 = arith.constant 1 : index
    %15 = vector.load %arg7[%c0_8, %c1] : memref<128x3xf32, #tpu.memory_space<vmem>>, vector<128x1xf32>
    %16 = vector.extract_strided_slice %9 {offsets = [1, 0], sizes = [1, 128], strides = [1, 1]} : vector<3x128xf32> to vector<1x128xf32>
    %17 = vector.broadcast %15 : vector<128x1xf32> to vector<128x128xf32>
    %18 = vector.broadcast %16 : vector<1x128xf32> to vector<128x128xf32>
    %19 = arith.mulf %17, %18 : vector<128x128xf32>
    %20 = arith.addf %14, %19 : vector<128x128xf32>
    %c0_9 = arith.constant 0 : index
    %c2 = arith.constant 2 : index
    %21 = vector.load %arg7[%c0_9, %c2] : memref<128x3xf32, #tpu.memory_space<vmem>>, vector<128x1xf32>
    %22 = vector.extract_strided_slice %9 {offsets = [2, 0], sizes = [1, 128], strides = [1, 1]} : vector<3x128xf32> to vector<1x128xf32>
    %23 = vector.broadcast %21 : vector<128x1xf32> to vector<128x128xf32>
    %24 = vector.broadcast %22 : vector<1x128xf32> to vector<128x128xf32>
    %25 = arith.mulf %23, %24 : vector<128x128xf32>
    %26 = arith.addf %20, %25 : vector<128x128xf32>
    %c0_10 = arith.constant 0 : index
    %c0_11 = arith.constant 0 : index
    %27 = vector.load %arg17[%c0_10, %c0_11] : memref<128x1xf32, #tpu.memory_space<vmem>>, vector<128x1xf32>
    %28 = vector.broadcast %27 : vector<128x1xf32> to vector<128x128xf32>
    %29 = arith.addf %26, %28 : vector<128x128xf32>
    %cst = arith.constant 0.000000e+00 : f32
    %30 = vector.broadcast %cst : f32 to vector<128x128xf32>
    %31 = arith.maximumf %29, %30 : vector<128x128xf32>
    %c0_12 = arith.constant 0 : index
    %c0_13 = arith.constant 0 : index
    %32 = vector.load %arg10[%c0_12, %c0_13] : memref<8x128xf32, #tpu.memory_space<vmem>>, vector<8x128xf32>
    %cst_14 = arith.constant dense<0.000000e+00> : vector<8x128xf32>
    %33 = tpu.matmul %32, %31, %cst_14 {dimension_numbers = #tpu.dot_dimension_numbers<[1], [0], [0], [1], [0, 0, 1, 1], [], []>} : vector<8x128xf32>, vector<128x128xf32>, vector<8x128xf32> -> vector<8x128xf32>
    %c0_15 = arith.constant 0 : index
    %c0_16 = arith.constant 0 : index
    %34 = vector.load %arg11[%c0_15, %c0_16] : memref<8x1xf32, #tpu.memory_space<vmem>>, vector<8x1xf32>
    %35 = vector.broadcast %34 : vector<8x1xf32> to vector<8x128xf32>
    %36 = arith.addf %33, %35 : vector<8x128xf32>
    %37 = vector.extract_strided_slice %36 {offsets = [0, 0], sizes = [1, 128], strides = [1, 1]} : vector<8x128xf32> to vector<1x128xf32>
    %38 = vector.extract_strided_slice %36 {offsets = [1, 0], sizes = [3, 128], strides = [1, 1]} : vector<8x128xf32> to vector<3x128xf32>
    %39 = vector.extract_strided_slice %36 {offsets = [4, 0], sizes = [3, 128], strides = [1, 1]} : vector<8x128xf32> to vector<3x128xf32>
    %c0_17 = arith.constant 0 : index
    %c0_18 = arith.constant 0 : index
    %c0_19 = arith.constant 0 : index
    %40 = vector.load %arg13[%c0_17, %c0_18, %c0_19] : memref<1x1x128xf32, #tpu.memory_space<vmem>>, vector<1x1x128xf32>
    %41 = vector.shape_cast %40 : vector<1x1x128xf32> to vector<1x128xf32>
    %c0_20 = arith.constant 0 : index
    %c0_21 = arith.constant 0 : index
    %c0_22 = arith.constant 0 : index
    %42 = vector.load %arg14[%c0_20, %c0_21, %c0_22] : memref<1x3x128xf32, #tpu.memory_space<vmem>>, vector<1x3x128xf32>
    %43 = vector.shape_cast %42 : vector<1x3x128xf32> to vector<3x128xf32>
    %c0_23 = arith.constant 0 : index
    %c0_24 = arith.constant 0 : index
    %c0_25 = arith.constant 0 : index
    %44 = vector.load %arg15[%c0_23, %c0_24, %c0_25] : memref<1x3x128xf32, #tpu.memory_space<vmem>>, vector<1x3x128xf32>
    %45 = vector.shape_cast %44 : vector<1x3x128xf32> to vector<3x128xf32>
    %c0_26 = arith.constant 0 : index
    %c0_27 = arith.constant 0 : index
    %46 = vector.load %arg18[%c0_26, %c0_27] : memref<1x1xf32, #tpu.memory_space<vmem>>, vector<1x1xf32>
    %47 = arith.subf %37, %41 : vector<1x128xf32>
    %48 = math.absf %47 : vector<1x128xf32>
    %49 = vector.shape_cast %48 : vector<1x128xf32> to vector<1x1x128xf32>
    %cst_28 = arith.constant dense<0.000000e+00> : vector<1xf32>
    %50 = vector.multi_reduction <add>, %49, %cst_28 [1, 2] : vector<1x1x128xf32> to vector<1xf32>
    %51 = vector.shape_cast %50 : vector<1xf32> to vector<1x1x1xf32>
    %52 = vector.extract %51[0, 0, 0] : f32 from vector<1x1x1xf32>
    %53 = vector.broadcast %52 : f32 to vector<1x1xf32>
    %54 = arith.addf %46, %53 : vector<1x1xf32>
    %c0_29 = arith.constant 0 : index
    %c0_30 = arith.constant 0 : index
    %55 = vector.load %arg18[%c0_29, %c0_30] : memref<1x1xf32, #tpu.memory_space<vmem>>, vector<1x1xf32>
    tpu.vector_store %arg18[%c0_29, %c0_30], %54 {strides = array<i32>} : memref<1x1xf32, #tpu.memory_space<vmem>>, vector<1x1xf32>,
    %c0_31 = arith.constant 0 : index
    %c0_32 = arith.constant 0 : index
    %56 = vector.load %arg19[%c0_31, %c0_32] : memref<1x1xf32, #tpu.memory_space<vmem>>, vector<1x1xf32>
    %57 = arith.subf %39, %43 : vector<3x128xf32>
    %58 = math.absf %57 : vector<3x128xf32>
    %59 = vector.shape_cast %58 : vector<3x128xf32> to vector<1x3x128xf32>
    %cst_33 = arith.constant dense<0.000000e+00> : vector<1xf32>
    %60 = vector.multi_reduction <add>, %59, %cst_33 [1, 2] : vector<1x3x128xf32> to vector<1xf32>
    %61 = vector.shape_cast %60 : vector<1xf32> to vector<1x1x1xf32>
    %62 = vector.extract %61[0, 0, 0] : f32 from vector<1x1x1xf32>
    %63 = vector.broadcast %62 : f32 to vector<1x1xf32>
    %64 = arith.addf %56, %63 : vector<1x1xf32>
    %c0_34 = arith.constant 0 : index
    %c0_35 = arith.constant 0 : index
    %65 = vector.load %arg19[%c0_34, %c0_35] : memref<1x1xf32, #tpu.memory_space<vmem>>, vector<1x1xf32>
    tpu.vector_store %arg19[%c0_34, %c0_35], %64 {strides = array<i32>} : memref<1x1xf32, #tpu.memory_space<vmem>>, vector<1x1xf32>,
    %66 = arith.mulf %38, %45 : vector<3x128xf32>
    %cst_36 = arith.constant dense<0.000000e+00> : vector<128xf32>
    %67 = vector.multi_reduction <add>, %66, %cst_36 [0] : vector<3x128xf32> to vector<128xf32>
    %68 = vector.shape_cast %67 : vector<128xf32> to vector<1x128xf32>
    %69 = arith.mulf %38, %38 : vector<3x128xf32>
    %cst_37 = arith.constant dense<0.000000e+00> : vector<128xf32>
    %70 = vector.multi_reduction <add>, %69, %cst_37 [0] : vector<3x128xf32> to vector<128xf32>
    %71 = vector.shape_cast %70 : vector<128xf32> to vector<1x128xf32>
    %72 = arith.mulf %45, %45 : vector<3x128xf32>
    %cst_38 = arith.constant dense<0.000000e+00> : vector<128xf32>
    %73 = vector.multi_reduction <add>, %72, %cst_38 [0] : vector<3x128xf32> to vector<128xf32>
    %74 = vector.shape_cast %73 : vector<128xf32> to vector<1x128xf32>
    %cst_39 = arith.constant 1.000000e-16 : f32
    %75 = vector.broadcast %cst_39 : f32 to vector<1x128xf32>
    %76 = arith.maximumf %71, %75 : vector<1x128xf32>
    %cst_40 = arith.constant 1.000000e-16 : f32
    %77 = vector.broadcast %cst_40 : f32 to vector<1x128xf32>
    %78 = arith.maximumf %74, %77 : vector<1x128xf32>
    %79 = arith.mulf %76, %78 : vector<1x128xf32>
    %80 = math.rsqrt %79 : vector<1x128xf32>
    %81 = arith.mulf %68, %80 : vector<1x128xf32>
    %c0_41 = arith.constant 0 : index
    %c0_42 = arith.constant 0 : index
    %82 = vector.load %arg20[%c0_41, %c0_42] : memref<1x1xf32, #tpu.memory_space<vmem>>, vector<1x1xf32>
    %cst_43 = arith.constant 1.000000e+00 : f32
    %83 = vector.broadcast %cst_43 : f32 to vector<1x128xf32>
    %84 = arith.subf %83, %81 : vector<1x128xf32>
    %85 = math.absf %84 : vector<1x128xf32>
    %86 = vector.shape_cast %85 : vector<1x128xf32> to vector<1x1x128xf32>
    %cst_44 = arith.constant dense<0.000000e+00> : vector<1xf32>
    %87 = vector.multi_reduction <add>, %86, %cst_44 [1, 2] : vector<1x1x128xf32> to vector<1xf32>
    %88 = vector.shape_cast %87 : vector<1xf32> to vector<1x1x1xf32>
    %89 = vector.extract %88[0, 0, 0] : f32 from vector<1x1x1xf32>
    %90 = vector.broadcast %89 : f32 to vector<1x1xf32>
    %91 = arith.addf %82, %90 : vector<1x1xf32>
    %c0_45 = arith.constant 0 : index
    %c0_46 = arith.constant 0 : index
    %92 = vector.load %arg20[%c0_45, %c0_46] : memref<1x1xf32, #tpu.memory_space<vmem>>, vector<1x1xf32>
    tpu.vector_store %arg20[%c0_45, %c0_46], %91 {strides = array<i32>} : memref<1x1xf32, #tpu.memory_space<vmem>>, vector<1x1xf32>,
    %c1_i32 = arith.constant 1 : i32
    %93 = arith.cmpi eq, %arg0, %c1_i32 : i32
    %c0_i32_47 = arith.constant 0 : i32
    %94 = arith.cmpi eq, %arg1, %c0_i32_47 : i32
    %95 = arith.andi %93, %94 : i1
    %96 = arith.extui %95 : i1 to i32
    %c0_i32_48 = arith.constant 0 : i32
    %97 = arith.cmpi ne, %96, %c0_i32_48 : i32
    scf.if %97 {
      %c0_49 = arith.constant 0 : index
      %c0_50 = arith.constant 0 : index
      %98 = vector.load %arg18[%c0_49, %c0_50] : memref<1x1xf32, #tpu.memory_space<vmem>>, vector<1x1xf32>
      %cst_51 = arith.constant 3.906250e-03 : f32
      %99 = vector.broadcast %cst_51 : f32 to vector<1x1xf32>
      %100 = arith.mulf %98, %99 : vector<1x1xf32>
      %c0_52 = arith.constant 0 : index
      %c0_53 = arith.constant 0 : index
      %101 = vector.load %arg19[%c0_52, %c0_53] : memref<1x1xf32, #tpu.memory_space<vmem>>, vector<1x1xf32>
      %cst_54 = arith.constant 0.00130208337 : f32
      %102 = vector.broadcast %cst_54 : f32 to vector<1x1xf32>
      %103 = arith.mulf %101, %102 : vector<1x1xf32>
      %c0_55 = arith.constant 0 : index
      %c0_56 = arith.constant 0 : index
      %104 = vector.load %arg20[%c0_55, %c0_56] : memref<1x1xf32, #tpu.memory_space<vmem>>, vector<1x1xf32>
      %cst_57 = arith.constant 3.906250e-03 : f32
      %105 = vector.broadcast %cst_57 : f32 to vector<1x1xf32>
      %106 = arith.mulf %104, %105 : vector<1x1xf32>
      %c0_58 = arith.constant 0 : index
      %107 = memref.load %arg2[%c0_58] : memref<3xf32, #tpu.memory_space<smem>>
      %108 = vector.broadcast %107 : f32 to vector<1x1xf32>
      %109 = arith.mulf %100, %108 : vector<1x1xf32>
      %c1_59 = arith.constant 1 : index
      %110 = memref.load %arg2[%c1_59] : memref<3xf32, #tpu.memory_space<smem>>
      %111 = vector.broadcast %110 : f32 to vector<1x1xf32>
      %112 = arith.mulf %103, %111 : vector<1x1xf32>
      %113 = arith.addf %109, %112 : vector<1x1xf32>
      %c2_60 = arith.constant 2 : index
      %114 = memref.load %arg2[%c2_60] : memref<3xf32, #tpu.memory_space<smem>>
      %115 = vector.broadcast %114 : f32 to vector<1x1xf32>
      %116 = arith.mulf %106, %115 : vector<1x1xf32>
      %117 = arith.addf %113, %116 : vector<1x1xf32>
      %c0_61 = arith.constant 0 : index
      %c0_62 = arith.constant 0 : index
      %118 = vector.load %arg16[%c0_61, %c0_62] : memref<1x4xf32, #tpu.memory_space<vmem>>, vector<1x1xf32>
      tpu.vector_store %arg16[%c0_61, %c0_62], %117 {strides = array<i32>} : memref<1x4xf32, #tpu.memory_space<vmem>>, vector<1x1xf32>,
      %c0_63 = arith.constant 0 : index
      %c1_64 = arith.constant 1 : index
      %119 = vector.load %arg16[%c0_63, %c1_64] : memref<1x4xf32, #tpu.memory_space<vmem>>, vector<1x1xf32>
      tpu.vector_store %arg16[%c0_63, %c1_64], %100 {strides = array<i32>} : memref<1x4xf32, #tpu.memory_space<vmem>>, vector<1x1xf32>,
      %c0_65 = arith.constant 0 : index
      %c2_66 = arith.constant 2 : index
      %120 = vector.load %arg16[%c0_65, %c2_66] : memref<1x4xf32, #tpu.memory_space<vmem>>, vector<1x1xf32>
      tpu.vector_store %arg16[%c0_65, %c2_66], %103 {strides = array<i32>} : memref<1x4xf32, #tpu.memory_space<vmem>>, vector<1x1xf32>,
      %c0_67 = arith.constant 0 : index
      %c3 = arith.constant 3 : index
      %121 = vector.load %arg16[%c0_67, %c3] : memref<1x4xf32, #tpu.memory_space<vmem>>, vector<1x1xf32>
      tpu.vector_store %arg16[%c0_67, %c3], %106 {strides = array<i32>} : memref<1x4xf32, #tpu.memory_space<vmem>>, vector<1x1xf32>,
    } else {
    }
    return
  }
  func.func @transform_0(%arg0: i32, %arg1: i32) -> i32 {
    %c0_i32 = arith.constant 0 : i32
    %c0_i32_0 = arith.constant 0 : i32
    return %c0_i32 : i32
  }
  func.func @transform_1(%arg0: i32, %arg1: i32) -> (i32, i32, i32) {
    %c0_i32 = arith.constant 0 : i32
    %c0_i32_0 = arith.constant 0 : i32
    %c0_i32_1 = arith.constant 0 : i32
    return %arg0, %c0_i32, %c0_i32_0 : i32, i32, i32
  }
  func.func @transform_2(%arg0: i32, %arg1: i32) -> (i32, i32, i32) {
    %c0_i32 = arith.constant 0 : i32
    %c0_i32_0 = arith.constant 0 : i32
    %c0_i32_1 = arith.constant 0 : i32
    return %arg0, %c0_i32, %c0_i32_0 : i32, i32, i32
  }
  func.func @transform_3(%arg0: i32, %arg1: i32) -> (i32, i32, i32) {
    %c0_i32 = arith.constant 0 : i32
    %c0_i32_0 = arith.constant 0 : i32
    %c0_i32_1 = arith.constant 0 : i32
    %c0_i32_2 = arith.constant 0 : i32
    return %c0_i32, %c0_i32_0, %c0_i32_1 : i32, i32, i32
  }
  func.func @transform_4(%arg0: i32, %arg1: i32) -> (i32, i32, i32) {
    %c0_i32 = arith.constant 0 : i32
    %c0_i32_0 = arith.constant 0 : i32
    %c0_i32_1 = arith.constant 0 : i32
    %c0_i32_2 = arith.constant 0 : i32
    return %c0_i32, %c0_i32_0, %c0_i32_1 : i32, i32, i32
  }
  func.func @transform_5(%arg0: i32, %arg1: i32) -> (i32, i32) {
    %c0_i32 = arith.constant 0 : i32
    %c0_i32_0 = arith.constant 0 : i32
    %c0_i32_1 = arith.constant 0 : i32
    return %c0_i32, %c0_i32_0 : i32, i32
  }
  func.func @transform_6(%arg0: i32, %arg1: i32) -> (i32, i32) {
    %c0_i32 = arith.constant 0 : i32
    %c0_i32_0 = arith.constant 0 : i32
    %c0_i32_1 = arith.constant 0 : i32
    return %c0_i32, %c0_i32_0 : i32, i32
  }
  func.func @transform_7(%arg0: i32, %arg1: i32) -> (i32, i32) {
    %c0_i32 = arith.constant 0 : i32
    %c0_i32_0 = arith.constant 0 : i32
    %c0_i32_1 = arith.constant 0 : i32
    return %c0_i32, %c0_i32_0 : i32, i32
  }
  func.func @transform_8(%arg0: i32, %arg1: i32) -> (i32, i32) {
    %c0_i32 = arith.constant 0 : i32
    %c0_i32_0 = arith.constant 0 : i32
    %c0_i32_1 = arith.constant 0 : i32
    return %c0_i32, %c0_i32_0 : i32, i32
  }
  func.func @transform_9(%arg0: i32, %arg1: i32) -> (i32, i32) {
    %c0_i32 = arith.constant 0 : i32
    %c0_i32_0 = arith.constant 0 : i32
    %c0_i32_1 = arith.constant 0 : i32
    return %c0_i32, %c0_i32_0 : i32, i32
  }
  func.func @transform_10(%arg0: i32, %arg1: i32) -> (i32, i32, i32) {
    %c0_i32 = arith.constant 0 : i32
    %c0_i32_0 = arith.constant 0 : i32
    return %arg0, %c0_i32, %arg1 : i32, i32, i32
  }
  func.func @transform_11(%arg0: i32, %arg1: i32) -> (i32, i32, i32) {
    %c0_i32 = arith.constant 0 : i32
    %c0_i32_0 = arith.constant 0 : i32
    return %arg0, %c0_i32, %arg1 : i32, i32, i32
  }
  func.func @transform_12(%arg0: i32, %arg1: i32) -> (i32, i32, i32) {
    %c0_i32 = arith.constant 0 : i32
    %c0_i32_0 = arith.constant 0 : i32
    return %arg0, %c0_i32, %arg1 : i32, i32, i32
  }
  func.func @transform_13(%arg0: i32, %arg1: i32) -> (i32, i32, i32) {
    %c0_i32 = arith.constant 0 : i32
    %c0_i32_0 = arith.constant 0 : i32
    return %arg0, %c0_i32, %arg1 : i32, i32, i32
  }
  func.func @transform_14(%arg0: i32, %arg1: i32) -> (i32, i32) {
    %c0_i32 = arith.constant 0 : i32
    %c0_i32_0 = arith.constant 0 : i32
    %c0_i32_1 = arith.constant 0 : i32
    return %c0_i32, %c0_i32_0 : i32, i32
  }
}

</mosaic_0001>

<llo_original>
// kernel: fused_forward.1
$region0: #{fused_forward.1}
  #allocation0 [shape = 'u32[]', space=smem, size = 0x4, offset = 0x4, fixed_abs, tag = 'smem constant byte address 0x4 - core index']
  #allocation1 [shape = 'u32[144,128]{1,0:T(1,128)}', space=vmem, size = 0x12000, scoped, tag = 'internal scratch']
  #allocation2 [shape = 'f32[128,1]{1,0:T(8,128)}', space=vmem, size = 0x10000, scoped, tag = 'scratch operand']
  #allocation3 [shape = 'f32[1,1]{1,0:T(1,128)}', space=vmem, size = 0x200, scoped, tag = 'scratch operand']
  #allocation4 [shape = 'f32[1,1]{1,0:T(1,128)}', space=vmem, size = 0x200, scoped, tag = 'scratch operand']
  #allocation5 [shape = 'f32[1,1]{1,0:T(1,128)}', space=vmem, size = 0x200, scoped, tag = 'scratch operand']
  %s0 = inlined_call_operand.vmem [shape: f32[3], index: 0, kind: input, shape index: {}]
  %s1 = inlined_call_operand.vmem [shape: f32[2,12,256], index: 1, kind: input, shape index: {}]
  %s2 = inlined_call_operand.vmem [shape: f32[2,12,256], index: 2, kind: input, shape index: {}]
  %s3 = inlined_call_operand.vmem [shape: f32[2,32,12], index: 3, kind: input, shape index: {}]
  %s4 = inlined_call_operand.vmem [shape: f32[2,32,1], index: 4, kind: input, shape index: {}]
  %s5 = inlined_call_operand.vmem [shape: f32[128,3], index: 5, kind: input, shape index: {}]
  %s6 = inlined_call_operand.vmem [shape: f32[128,64], index: 6, kind: input, shape index: {}]
  %s7 = inlined_call_operand.vmem [shape: f32[128,1], index: 7, kind: input, shape index: {}]
  %s8 = inlined_call_operand.vmem [shape: f32[8,128], index: 8, kind: input, shape index: {}]
  %s9 = inlined_call_operand.vmem [shape: f32[8,1], index: 9, kind: input, shape index: {}]
  %s10 = inlined_call_operand.vmem [shape: f32[2,3,128], index: 10, kind: input, shape index: {}]
  %s11 = inlined_call_operand.vmem [shape: f32[2,1,128], index: 11, kind: input, shape index: {}]
  %s12 = inlined_call_operand.vmem [shape: f32[2,3,128], index: 12, kind: input, shape index: {}]
  %s13 = inlined_call_operand.vmem [shape: f32[2,3,128], index: 13, kind: input, shape index: {}]
  %s14 = inlined_call_operand.hbm [shape: f32[1,4], index: 14, kind: output, shape index: {}]
  %s15 = sld [smem:[#allocation0]]
  $region105: #{fused_forward.1} parent=0
    _
  %s17 = ssub.s32 1, %s15
  %s18 = scalar_select 0, %s17, %s15
  $region1: #{fused_forward.1} parent=0
    #allocation6 [shape = 'u8[512]{0}', space=smem, size = 0x200, scoped, tag = 'input window, operand 0, single buffered']
    #allocation7 [shape = 's32[2]{0}', space=sflag, size = 0x8, scoped, tag = 'scoped memory for fused_forward.1']
    #allocation8 [shape = 's32[2]{0}', space=sflag, size = 0x8, scoped, tag = 'scoped memory for fused_forward.1']
    #allocation9 [shape = 'u8[512]{0}', space=vmem, size = 0x400, scoped, tag = 'output window, operand 0, single buffered']
    %19 = vsyncpa [#allocation8], 0
    %20 = vsyncpa [#allocation7], 0
    loop: start=0, step=1, limit=4
    $region2: #{fused_forward.1} parent=1 // loop_pre_header
      _
    $region3: #{fused_forward.1} parent=1 // loop_header
      %s22 = sphi 0, %s26
      %p23 = scmp.ge.s32.totalorder %s22, 4
      %s29 = sphi 0, %s41
      %s30 = sphi 0, %s37
      %s31 = sphi 0, %s29
      %s32 = sphi 0, %s30
      %s33 = sphi 0, %s31
      %s34 = sphi 0, %s32
      %s42 = sphi 0, %s42
      %s44 = sphi 0, %s42
      %s45 = sphi 0, %s44
      %s59 = sphi 0, %s45
      %s65 = sphi 0, %s67
      %s68 = sphi 0, %s65
      %s69 = sphi 0, %s68
      %s85 = sphi 0, %s69
      %s91 = sphi 0, %s93
      %s94 = sphi 0, %s91
      %s95 = sphi 0, %s94
      %s111 = sphi 0, %s95
      %s115 = sphi 0, %s115
      %s117 = sphi 0, %s115
      %s118 = sphi 0, %s117
      %s132 = sphi 0, %s118
      %s136 = sphi 0, %s136
      %s138 = sphi 0, %s136
      %s139 = sphi 0, %s138
      %s153 = sphi 0, %s139
      %s157 = sphi 0, %s157
      %s159 = sphi 0, %s157
      %s160 = sphi 0, %s159
      %s174 = sphi 0, %s160
      %s178 = sphi 0, %s178
      %s180 = sphi 0, %s178
      %s181 = sphi 0, %s180
      %s195 = sphi 0, %s181
      %s199 = sphi 0, %s199
      %s201 = sphi 0, %s199
      %s202 = sphi 0, %s201
      %s216 = sphi 0, %s202
      %s220 = sphi 0, %s220
      %s222 = sphi 0, %s220
      %s223 = sphi 0, %s222
      %s237 = sphi 0, %s223
      %s241 = sphi 0, %s241
      %s243 = sphi 0, %s241
      %s244 = sphi 0, %s243
      %s258 = sphi 0, %s244
      %s266 = sphi 0, %s268
      %s269 = sphi 0, %s266
      %s270 = sphi 0, %s269
      %s286 = sphi 0, %s270
      %s294 = sphi 0, %s296
      %s297 = sphi 0, %s294
      %s298 = sphi 0, %s297
      %s314 = sphi 0, %s298
      %s322 = sphi 0, %s324
      %s325 = sphi 0, %s322
      %s326 = sphi 0, %s325
      %s342 = sphi 0, %s326
      %s350 = sphi 0, %s352
      %s353 = sphi 0, %s350
      %s354 = sphi 0, %s353
      %s370 = sphi 0, %s354
      %s374 = sphi 0, %s374
      %s376 = sphi 0, %s374
      %s377 = sphi 0, %s376
      %s391 = sphi 0, %s377
    $region4: #{fused_forward.1} parent=1 // loop_header_branch
      %25 = sbr.rel (%p23) target = $region8
    $region5: #{fused_forward.1} parent=1 // loop_body
      %s27 = ssub.s32 %s22, 1
      %s28 = ssub.s32 %s22, 2
      %s35 = sadd.s32 1, %s30
      %p36 = scmp.ge.s32.totalorder %s35, 1
      %s37 = scalar_select %p36, 0, %s35
      %s38 = sadd.s32 1, %s29
      %s39 = scalar_select %p36, %s38, %s29
      %p40 = scmp.ge.s32.totalorder %s39, 2
      %s41 = scalar_select %p40, 0, %s39
      %s43 = sadd.s32 %s42, 1
      %p46 = scmp.eq.s32.totalorder %s22, 1
      %p47 = scmp.ne.s32.totalorder %s42, %s44
      %p48 = scmp.eq.s32.totalorder %s22, 0
      %p49 = por %p47, %p48
      %p50 = scmp.ne.s32.totalorder %s42, %s44
      %p51 = scmp.eq.s32.totalorder %s27, 1
      %p52 = por %p50, %p51
      %p53 = scmp.ne.s32.totalorder %s44, %s45
      %p54 = scmp.eq.s32.totalorder %s27, 0
      %p55 = por %p53, %p54
      %p56 = scmp.ne.s32.totalorder %s44, %s45
      %p57 = scmp.eq.s32.totalorder %s28, 1
      %p58 = por %p56, %p57
      %p60 = scmp.ne.s32.totalorder %s45, %s59
      %p61 = scmp.eq.s32.totalorder %s28, 0
      %p62 = por %p60, %p61
      %s63 = ssub.s32 %s29, %s41
      %p64 = scmp.eq.s32.totalorder %s63, 0
      %s66 = sadd.s32 %s65, 1
      %s67 = scalar_select %p64, %s65, %s66
      %p70 = pneg %p64
      %p71 = scmp.eq.s32.totalorder %s22, 1
      %p72 = por %p70, %p71
      %p73 = scmp.ne.s32.totalorder %s65, %s68
      %p74 = scmp.eq.s32.totalorder %s22, 0
      %p75 = por %p73, %p74
      %p76 = scmp.ne.s32.totalorder %s65, %s68
      %p77 = scmp.eq.s32.totalorder %s27, 1
      %p78 = por %p76, %p77
      %p79 = scmp.ne.s32.totalorder %s68, %s69
      %p80 = scmp.eq.s32.totalorder %s27, 0
      %p81 = por %p79, %p80
      %p82 = scmp.ne.s32.totalorder %s68, %s69
      %p83 = scmp.eq.s32.totalorder %s28, 1
      %p84 = por %p82, %p83
      %p86 = scmp.ne.s32.totalorder %s69, %s85
      %p87 = scmp.eq.s32.totalorder %s28, 0
      %p88 = por %p86, %p87
      %s89 = ssub.s32 %s29, %s41
      %p90 = scmp.eq.s32.totalorder %s89, 0
      %s92 = sadd.s32 %s91, 1
      %s93 = scalar_select %p90, %s91, %s92
      %p96 = pneg %p90
      %p97 = scmp.eq.s32.totalorder %s22, 1
      %p98 = por %p96, %p97
      %p99 = scmp.ne.s32.totalorder %s91, %s94
      %p100 = scmp.eq.s32.totalorder %s22, 0
      %p101 = por %p99, %p100
      %p102 = scmp.ne.s32.totalorder %s91, %s94
      %p103 = scmp.eq.s32.totalorder %s27, 1
      %p104 = por %p102, %p103
      %p105 = scmp.ne.s32.totalorder %s94, %s95
      %p106 = scmp.eq.s32.totalorder %s27, 0
      %p107 = por %p105, %p106
      %p108 = scmp.ne.s32.totalorder %s94, %s95
      %p109 = scmp.eq.s32.totalorder %s28, 1
      %p110 = por %p108, %p109
      %p112 = scmp.ne.s32.totalorder %s95, %s111
      %p113 = scmp.eq.s32.totalorder %s28, 0
      %p114 = por %p112, %p113
      %s116 = sadd.s32 %s115, 1
      %p119 = scmp.eq.s32.totalorder %s22, 1
      %p120 = scmp.ne.s32.totalorder %s115, %s117
      %p121 = scmp.eq.s32.totalorder %s22, 0
      %p122 = por %p120, %p121
      %p123 = scmp.ne.s32.totalorder %s115, %s117
      %p124 = scmp.eq.s32.totalorder %s27, 1
      %p125 = por %p123, %p124
      %p126 = scmp.ne.s32.totalorder %s117, %s118
      %p127 = scmp.eq.s32.totalorder %s27, 0
      %p128 = por %p126, %p127
      %p129 = scmp.ne.s32.totalorder %s117, %s118
      %p130 = scmp.eq.s32.totalorder %s28, 1
      %p131 = por %p129, %p130
      %p133 = scmp.ne.s32.totalorder %s118, %s132
      %p134 = scmp.eq.s32.totalorder %s28, 0
      %p135 = por %p133, %p134
      %s137 = sadd.s32 %s136, 1
      %p140 = scmp.eq.s32.totalorder %s22, 1
      %p141 = scmp.ne.s32.totalorder %s136, %s138
      %p142 = scmp.eq.s32.totalorder %s22, 0
      %p143 = por %p141, %p142
      %p144 = scmp.ne.s32.totalorder %s136, %s138
      %p145 = scmp.eq.s32.totalorder %s27, 1
      %p146 = por %p144, %p145
      %p147 = scmp.ne.s32.totalorder %s138, %s139
      %p148 = scmp.eq.s32.totalorder %s27, 0
      %p149 = por %p147, %p148
      %p150 = scmp.ne.s32.totalorder %s138, %s139
      %p151 = scmp.eq.s32.totalorder %s28, 1
      %p152 = por %p150, %p151
      %p154 = scmp.ne.s32.totalorder %s139, %s153
      %p155 = scmp.eq.s32.totalorder %s28, 0
      %p156 = por %p154, %p155
      %s158 = sadd.s32 %s157, 1
      %p161 = scmp.eq.s32.totalorder %s22, 1
      %p162 = scmp.ne.s32.totalorder %s157, %s159
      %p163 = scmp.eq.s32.totalorder %s22, 0
      %p164 = por %p162, %p163
      %p165 = scmp.ne.s32.totalorder %s157, %s159
      %p166 = scmp.eq.s32.totalorder %s27, 1
      %p167 = por %p165, %p166
      %p168 = scmp.ne.s32.totalorder %s159, %s160
      %p169 = scmp.eq.s32.totalorder %s27, 0
      %p170 = por %p168, %p169
      %p171 = scmp.ne.s32.totalorder %s159, %s160
      %p172 = scmp.eq.s32.totalorder %s28, 1
      %p173 = por %p171, %p172
      %p175 = scmp.ne.s32.totalorder %s160, %s174
      %p176 = scmp.eq.s32.totalorder %s28, 0
      %p177 = por %p175, %p176
      %s179 = sadd.s32 %s178, 1
      %p182 = scmp.eq.s32.totalorder %s22, 1
      %p183 = scmp.ne.s32.totalorder %s178, %s180
      %p184 = scmp.eq.s32.totalorder %s22, 0
      %p185 = por %p183, %p184
      %p186 = scmp.ne.s32.totalorder %s178, %s180
      %p187 = scmp.eq.s32.totalorder %s27, 1
      %p188 = por %p186, %p187
      %p189 = scmp.ne.s32.totalorder %s180, %s181
      %p190 = scmp.eq.s32.totalorder %s27, 0
      %p191 = por %p189, %p190
      %p192 = scmp.ne.s32.totalorder %s180, %s181
      %p193 = scmp.eq.s32.totalorder %s28, 1
      %p194 = por %p192, %p193
      %p196 = scmp.ne.s32.totalorder %s181, %s195
      %p197 = scmp.eq.s32.totalorder %s28, 0
      %p198 = por %p196, %p197
      %s200 = sadd.s32 %s199, 1
      %p203 = scmp.eq.s32.totalorder %s22, 1
      %p204 = scmp.ne.s32.totalorder %s199, %s201
      %p205 = scmp.eq.s32.totalorder %s22, 0
      %p206 = por %p204, %p205
      %p207 = scmp.ne.s32.totalorder %s199, %s201
      %p208 = scmp.eq.s32.totalorder %s27, 1
      %p209 = por %p207, %p208
      %p210 = scmp.ne.s32.totalorder %s201, %s202
      %p211 = scmp.eq.s32.totalorder %s27, 0
      %p212 = por %p210, %p211
      %p213 = scmp.ne.s32.totalorder %s201, %s202
      %p214 = scmp.eq.s32.totalorder %s28, 1
      %p215 = por %p213, %p214
      %p217 = scmp.ne.s32.totalorder %s202, %s216
      %p218 = scmp.eq.s32.totalorder %s28, 0
      %p219 = por %p217, %p218
      %s221 = sadd.s32 %s220, 1
      %p224 = scmp.eq.s32.totalorder %s22, 1
      %p225 = scmp.ne.s32.totalorder %s220, %s222
      %p226 = scmp.eq.s32.totalorder %s22, 0
      %p227 = por %p225, %p226
      %p228 = scmp.ne.s32.totalorder %s220, %s222
      %p229 = scmp.eq.s32.totalorder %s27, 1
      %p230 = por %p228, %p229
      %p231 = scmp.ne.s32.totalorder %s222, %s223
      %p232 = scmp.eq.s32.totalorder %s27, 0
      %p233 = por %p231, %p232
      %p234 = scmp.ne.s32.totalorder %s222, %s223
      %p235 = scmp.eq.s32.totalorder %s28, 1
      %p236 = por %p234, %p235
      %p238 = scmp.ne.s32.totalorder %s223, %s237
      %p239 = scmp.eq.s32.totalorder %s28, 0
      %p240 = por %p238, %p239
      %s242 = sadd.s32 %s241, 1
      %p245 = scmp.eq.s32.totalorder %s22, 1
      %p246 = scmp.ne.s32.totalorder %s241, %s243
      %p247 = scmp.eq.s32.totalorder %s22, 0
      %p248 = por %p246, %p247
      %p249 = scmp.ne.s32.totalorder %s241, %s243
      %p250 = scmp.eq.s32.totalorder %s27, 1
      %p251 = por %p249, %p250
      %p252 = scmp.ne.s32.totalorder %s243, %s244
      %p253 = scmp.eq.s32.totalorder %s27, 0
      %p254 = por %p252, %p253
      %p255 = scmp.ne.s32.totalorder %s243, %s244
      %p256 = scmp.eq.s32.totalorder %s28, 1
      %p257 = por %p255, %p256
      %p259 = scmp.ne.s32.totalorder %s244, %s258
      %p260 = scmp.eq.s32.totalorder %s28, 0
      %p261 = por %p259, %p260
      %s262 = ssub.s32 %s29, %s41
      %s263 = ssub.s32 %s30, %s37
      %s264 = sor.u32 %s262, %s263
      %p265 = scmp.eq.s32.totalorder %s264, 0
      %s267 = sadd.s32 %s266, 1
      %s268 = scalar_select %p265, %s266, %s267
      %p271 = pneg %p265
      %p272 = scmp.eq.s32.totalorder %s22, 1
      %p273 = por %p271, %p272
      %p274 = scmp.ne.s32.totalorder %s266, %s269
      %p275 = scmp.eq.s32.totalorder %s22, 0
      %p276 = por %p274, %p275
      %p277 = scmp.ne.s32.totalorder %s266, %s269
      %p278 = scmp.eq.s32.totalorder %s27, 1
      %p279 = por %p277, %p278
      %p280 = scmp.ne.s32.totalorder %s269, %s270
      %p281 = scmp.eq.s32.totalorder %s27, 0
      %p282 = por %p280, %p281
      %p283 = scmp.ne.s32.totalorder %s269, %s270
      %p284 = scmp.eq.s32.totalorder %s28, 1
      %p285 = por %p283, %p284
      %p287 = scmp.ne.s32.totalorder %s270, %s286
      %p288 = scmp.eq.s32.totalorder %s28, 0
      %p289 = por %p287, %p288
      %s290 = ssub.s32 %s29, %s41
      %s291 = ssub.s32 %s30, %s37
      %s292 = sor.u32 %s290, %s291
      %p293 = scmp.eq.s32.totalorder %s292, 0
      %s295 = sadd.s32 %s294, 1
      %s296 = scalar_select %p293, %s294, %s295
      %p299 = pneg %p293
      %p300 = scmp.eq.s32.totalorder %s22, 1
      %p301 = por %p299, %p300
      %p302 = scmp.ne.s32.totalorder %s294, %s297
      %p303 = scmp.eq.s32.totalorder %s22, 0
      %p304 = por %p302, %p303
      %p305 = scmp.ne.s32.totalorder %s294, %s297
      %p306 = scmp.eq.s32.totalorder %s27, 1
      %p307 = por %p305, %p306
      %p308 = scmp.ne.s32.totalorder %s297, %s298
      %p309 = scmp.eq.s32.totalorder %s27, 0
      %p310 = por %p308, %p309
      %p311 = scmp.ne.s32.totalorder %s297, %s298
      %p312 = scmp.eq.s32.totalorder %s28, 1
      %p313 = por %p311, %p312
      %p315 = scmp.ne.s32.totalorder %s298, %s314
      %p316 = scmp.eq.s32.totalorder %s28, 0
      %p317 = por %p315, %p316
      %s318 = ssub.s32 %s29, %s41
      %s319 = ssub.s32 %s30, %s37
      %s320 = sor.u32 %s318, %s319
      %p321 = scmp.eq.s32.totalorder %s320, 0
      %s323 = sadd.s32 %s322, 1
      %s324 = scalar_select %p321, %s322, %s323
      %p327 = pneg %p321
      %p328 = scmp.eq.s32.totalorder %s22, 1
      %p329 = por %p327, %p328
      %p330 = scmp.ne.s32.totalorder %s322, %s325
      %p331 = scmp.eq.s32.totalorder %s22, 0
      %p332 = por %p330, %p331
      %p333 = scmp.ne.s32.totalorder %s322, %s325
      %p334 = scmp.eq.s32.totalorder %s27, 1
      %p335 = por %p333, %p334
      %p336 = scmp.ne.s32.totalorder %s325, %s326
      %p337 = scmp.eq.s32.totalorder %s27, 0
      %p338 = por %p336, %p337
      %p339 = scmp.ne.s32.totalorder %s325, %s326
      %p340 = scmp.eq.s32.totalorder %s28, 1
      %p341 = por %p339, %p340
      %p343 = scmp.ne.s32.totalorder %s326, %s342
      %p344 = scmp.eq.s32.totalorder %s28, 0
      %p345 = por %p343, %p344
      %s346 = ssub.s32 %s29, %s41
      %s347 = ssub.s32 %s30, %s37
      %s348 = sor.u32 %s346, %s347
      %p349 = scmp.eq.s32.totalorder %s348, 0
      %s351 = sadd.s32 %s350, 1
      %s352 = scalar_select %p349, %s350, %s351
      %p355 = pneg %p349
      %p356 = scmp.eq.s32.totalorder %s22, 1
      %p357 = por %p355, %p356
      %p358 = scmp.ne.s32.totalorder %s350, %s353
      %p359 = scmp.eq.s32.totalorder %s22, 0
      %p360 = por %p358, %p359
      %p361 = scmp.ne.s32.totalorder %s350, %s353
      %p362 = scmp.eq.s32.totalorder %s27, 1
      %p363 = por %p361, %p362
      %p364 = scmp.ne.s32.totalorder %s353, %s354
      %p365 = scmp.eq.s32.totalorder %s27, 0
      %p366 = por %p364, %p365
      %p367 = scmp.ne.s32.totalorder %s353, %s354
      %p368 = scmp.eq.s32.totalorder %s28, 1
      %p369 = por %p367, %p368
      %p371 = scmp.ne.s32.totalorder %s354, %s370
      %p372 = scmp.eq.s32.totalorder %s28, 0
      %p373 = por %p371, %p372
      %s375 = sadd.s32 %s374, 1
      %p378 = scmp.eq.s32.totalorder %s22, 1
      %p379 = scmp.ne.s32.totalorder %s374, %s376
      %p380 = scmp.eq.s32.totalorder %s22, 0
      %p381 = por %p379, %p380
      %p382 = scmp.ne.s32.totalorder %s374, %s376
      %p383 = scmp.eq.s32.totalorder %s27, 1
      %p384 = por %p382, %p383
      %p385 = scmp.ne.s32.totalorder %s376, %s377
      %p386 = scmp.eq.s32.totalorder %s27, 0
      %p387 = por %p385, %p386
      %p388 = scmp.ne.s32.totalorder %s376, %s377
      %p389 = scmp.eq.s32.totalorder %s28, 1
      %p390 = por %p388, %p389
      %p392 = scmp.ne.s32.totalorder %s377, %s391
      %p393 = scmp.eq.s32.totalorder %s28, 0
      %p394 = por %p392, %p393
      %p395 = scmp.le.s32.totalorder 1, %s22
      %p396 = scmp.lt.s32.totalorder %s22, 3
      %p397 = pnand %p395, %p396
      %p398 = pneg %p397
      // Predicated region
      $region9: #{fused_forward.1} parent=5 // pred_check
        _
      $region10: #{fused_forward.1} parent=5 // pred_check_branch
        %400 = sbr.rel (%p397) target = $region12
      $region11: #{fused_forward.1} parent=5 // pred_region
        %s401 = ssub.s32 %s22, 1
        // Predicated region
        $region13: #{fused_forward.1} parent=11 // pred_check
          %p402 = pneg %p55
        $region14: #{fused_forward.1} parent=11 // pred_check_branch
          %404 = sbr.rel (%p402) target = $region16
        $region15: #{fused_forward.1} parent=11 // pred_region
          %s406 = ssub.s32 16, 16
          %407 = vsyncadd [#allocation8], %s406
          %s409 = sshll.u32 %s0, 4
          %s410 = int_to_ptr.vmem [resolvable:$true] %s409
          %412 = dma.vmem_to_smem %s410, 16, [#allocation6], [#allocation8]
        $region16: #{fused_forward.1} parent=11 // pred_fallthru
          _
        // Predicated region
        $region17: #{fused_forward.1} parent=11 // pred_check
          %p413 = pneg %p128
        $region18: #{fused_forward.1} parent=11 // pred_check_branch
          %415 = sbr.rel (%p413) target = $region20
        $region19: #{fused_forward.1} parent=11 // pred_region
          _
        $region20: #{fused_forward.1} parent=11 // pred_fallthru
          _
        // Predicated region
        $region21: #{fused_forward.1} parent=11 // pred_check
          %p416 = pneg %p149
        $region22: #{fused_forward.1} parent=11 // pred_check_branch
          %418 = sbr.rel (%p416) target = $region24
        $region23: #{fused_forward.1} parent=11 // pred_region
          _
        $region24: #{fused_forward.1} parent=11 // pred_fallthru
          _
        // Predicated region
        $region25: #{fused_forward.1} parent=11 // pred_check
          %p419 = pneg %p170
        $region26: #{fused_forward.1} parent=11 // pred_check_branch
          %421 = sbr.rel (%p419) target = $region28
        $region27: #{fused_forward.1} parent=11 // pred_region
          _
        $region28: #{fused_forward.1} parent=11 // pred_fallthru
          _
        // Predicated region
        $region29: #{fused_forward.1} parent=11 // pred_check
          %p422 = pneg %p191
        $region30: #{fused_forward.1} parent=11 // pred_check_branch
          %424 = sbr.rel (%p422) target = $region32
        $region31: #{fused_forward.1} parent=11 // pred_region
          _
        $region32: #{fused_forward.1} parent=11 // pred_fallthru
          _
        // Predicated region
        $region33: #{fused_forward.1} parent=11 // pred_check
          %p425 = pneg %p212
        $region34: #{fused_forward.1} parent=11 // pred_check_branch
          %427 = sbr.rel (%p425) target = $region36
        $region35: #{fused_forward.1} parent=11 // pred_region
          _
        $region36: #{fused_forward.1} parent=11 // pred_fallthru
          _
        // Predicated region
        $region37: #{fused_forward.1} parent=11 // pred_check
          %p428 = pneg %p233
        $region38: #{fused_forward.1} parent=11 // pred_check_branch
          %430 = sbr.rel (%p428) target = $region40
        $region39: #{fused_forward.1} parent=11 // pred_region
          _
        $region40: #{fused_forward.1} parent=11 // pred_fallthru
          _
        // Predicated region
        $region41: #{fused_forward.1} parent=11 // pred_check
          %p431 = pneg %p254
        $region42: #{fused_forward.1} parent=11 // pred_check_branch
          %433 = sbr.rel (%p431) target = $region44
        $region43: #{fused_forward.1} parent=11 // pred_region
          _
        $region44: #{fused_forward.1} parent=11 // pred_fallthru
          _
      $region12: #{fused_forward.1} parent=5 // pred_fallthru
        _
      %p434 = scmp.lt.s32.totalorder %s22, 2
      // Predicated region
      $region45: #{fused_forward.1} parent=5 // pred_check
        %p435 = pneg %p434
      $region46: #{fused_forward.1} parent=5 // pred_check_branch
        %437 = sbr.rel (%p435) target = $region48
      $region47: #{fused_forward.1} parent=5 // pred_region
        // Predicated region
        $region49: #{fused_forward.1} parent=47 // pred_check
          %p438 = pneg %p75
        $region50: #{fused_forward.1} parent=47 // pred_check_branch
          %440 = sbr.rel (%p438) target = $region52
        $region51: #{fused_forward.1} parent=47 // pred_region
          %p441 = scmp.lt.s32.totalorder %s29, 1
          %s442 = scalar_select %p441, %s29, 1
          %s443 = smul.addr %s442, 4
          %s444 = smul.addr %s443, 8
          %s445 = scalar_lea.vmem %s1, %s444
        $region52: #{fused_forward.1} parent=47 // pred_fallthru
          _
        // Predicated region
        $region53: #{fused_forward.1} parent=47 // pred_check
          %p446 = pneg %p101
        $region54: #{fused_forward.1} parent=47 // pred_check_branch
          %448 = sbr.rel (%p446) target = $region56
        $region55: #{fused_forward.1} parent=47 // pred_region
          %p449 = scmp.lt.s32.totalorder %s29, 1
          %s450 = scalar_select %p449, %s29, 1
          %s451 = smul.addr %s450, 4
          %s452 = smul.addr %s451, 8
          %s453 = scalar_lea.vmem %s2, %s452
        $region56: #{fused_forward.1} parent=47 // pred_fallthru
          _
        // Predicated region
        $region57: #{fused_forward.1} parent=47 // pred_check
          %p454 = pneg %p276
        $region58: #{fused_forward.1} parent=47 // pred_check_branch
          %456 = sbr.rel (%p454) target = $region60
        $region59: #{fused_forward.1} parent=47 // pred_region
          %p457 = scmp.lt.s32.totalorder %s29, 1
          %s458 = scalar_select %p457, %s29, 1
          %p459 = scmp.lt.s32.totalorder %s30, 0
          %s460 = scalar_select %p459, %s30, 0
          %s461 = sadd.s32 %s460, %s458
          %s462 = smul.addr %s461, 4
          %s463 = scalar_lea.vmem %s10, %s462
        $region60: #{fused_forward.1} parent=47 // pred_fallthru
          _
        // Predicated region
        $region61: #{fused_forward.1} parent=47 // pred_check
          %p464 = pneg %p304
        $region62: #{fused_forward.1} parent=47 // pred_check_branch
          %466 = sbr.rel (%p464) target = $region64
        $region63: #{fused_forward.1} parent=47 // pred_region
          %p467 = scmp.lt.s32.totalorder %s29, 1
          %s468 = scalar_select %p467, %s29, 1
          %p469 = scmp.lt.s32.totalorder %s30, 0
          %s470 = scalar_select %p469, %s30, 0
          %s471 = sadd.s32 %s470, %s468
          %s472 = scalar_lea.vmem %s11, %s471
        $region64: #{fused_forward.1} parent=47 // pred_fallthru
          _
        // Predicated region
        $region65: #{fused_forward.1} parent=47 // pred_check
          %p473 = pneg %p332
        $region66: #{fused_forward.1} parent=47 // pred_check_branch
          %475 = sbr.rel (%p473) target = $region68
        $region67: #{fused_forward.1} parent=47 // pred_region
          %p476 = scmp.lt.s32.totalorder %s29, 1
          %s477 = scalar_select %p476, %s29, 1
          %p478 = scmp.lt.s32.totalorder %s30, 0
          %s479 = scalar_select %p478, %s30, 0
          %s480 = sadd.s32 %s479, %s477
          %s481 = smul.addr %s480, 4
          %s482 = scalar_lea.vmem %s12, %s481
        $region68: #{fused_forward.1} parent=47 // pred_fallthru
          _
        // Predicated region
        $region69: #{fused_forward.1} parent=47 // pred_check
          %p483 = pneg %p360
        $region70: #{fused_forward.1} parent=47 // pred_check_branch
          %485 = sbr.rel (%p483) target = $region72
        $region71: #{fused_forward.1} parent=47 // pred_region
          %p486 = scmp.lt.s32.totalorder %s29, 1
          %s487 = scalar_select %p486, %s29, 1
          %p488 = scmp.lt.s32.totalorder %s30, 0
          %s489 = scalar_select %p488, %s30, 0
          %s490 = sadd.s32 %s489, %s487
          %s491 = smul.addr %s490, 4
          %s492 = scalar_lea.vmem %s13, %s491
        $region72: #{fused_forward.1} parent=47 // pred_fallthru
          _
      $region48: #{fused_forward.1} parent=5 // pred_fallthru
        _
      %p493 = scmp.le.s32.totalorder 1, %s22
      %p494 = scmp.lt.s32.totalorder %s22, 3
      %p495 = pnand %p493, %p494
      %p496 = pneg %p495
      // Predicated region
      $region73: #{fused_forward.1} parent=5 // pred_check
        _
      $region74: #{fused_forward.1} parent=5 // pred_check_branch
        %498 = sbr.rel (%p495) target = $region76
      $region75: #{fused_forward.1} parent=5 // pred_region
        %s499 = ssub.s32 %s22, 1
        // Predicated region
        $region77: #{fused_forward.1} parent=75 // pred_check
          %p500 = pneg %p55
        $region78: #{fused_forward.1} parent=75 // pred_check_branch
          %502 = sbr.rel (%p500) target = $region80
        $region79: #{fused_forward.1} parent=75 // pred_region
          %503 = dma.done [#allocation8], 16
        $region80: #{fused_forward.1} parent=75 // pred_fallthru
          _
        %504 = sfence
        %p505 = pneg %p55
        %p506 = pneg %p52
        %p507 = scmp.lt.s32.totalorder %s31, 1
        %s508 = scalar_select %p507, %s31, 1
        %s509 = smul.addr %s508, 4
        %s510 = smul.addr %s509, 8
        %s511 = scalar_lea.vmem %s1, %s510
        %p512 = pneg %p81
        %p513 = pneg %p78
        %p514 = scmp.lt.s32.totalorder %s31, 1
        %s515 = scalar_select %p514, %s31, 1
        %s516 = smul.addr %s515, 4
        %s517 = smul.addr %s516, 8
        %s518 = scalar_lea.vmem %s2, %s517
        %p519 = pneg %p107
        %p520 = pneg %p104
        %p521 = pneg %p128
        %p522 = pneg %p125
        %p523 = pneg %p149
        %p524 = pneg %p146
        %p525 = pneg %p170
        %p526 = pneg %p167
        %p527 = pneg %p191
        %p528 = pneg %p188
        %p529 = pneg %p212
        %p530 = pneg %p209
        %p531 = pneg %p233
        %p532 = pneg %p230
        %p533 = pneg %p254
        %p534 = pneg %p251
        %p535 = scmp.lt.s32.totalorder %s31, 1
        %s536 = scalar_select %p535, %s31, 1
        %p537 = scmp.lt.s32.totalorder %s32, 0
        %s538 = scalar_select %p537, %s32, 0
        %s539 = sadd.s32 %s538, %s536
        %s540 = smul.addr %s539, 4
        %s541 = scalar_lea.vmem %s10, %s540
        %p542 = pneg %p282
        %p543 = pneg %p279
        %p544 = scmp.lt.s32.totalorder %s31, 1
        %s545 = scalar_select %p544, %s31, 1
        %p546 = scmp.lt.s32.totalorder %s32, 0
        %s547 = scalar_select %p546, %s32, 0
        %s548 = sadd.s32 %s547, %s545
        %s549 = scalar_lea.vmem %s11, %s548
        %p550 = pneg %p310
        %p551 = pneg %p307
        %p552 = scmp.lt.s32.totalorder %s31, 1
        %s553 = scalar_select %p552, %s31, 1
        %p554 = scmp.lt.s32.totalorder %s32, 0
        %s555 = scalar_select %p554, %s32, 0
        %s556 = sadd.s32 %s555, %s553
        %s557 = smul.addr %s556, 4
        %s558 = scalar_lea.vmem %s12, %s557
        %p559 = pneg %p338
        %p560 = pneg %p335
        %p561 = scmp.lt.s32.totalorder %s31, 1
        %s562 = scalar_select %p561, %s31, 1
        %p563 = scmp.lt.s32.totalorder %s32, 0
        %s564 = scalar_select %p563, %s32, 0
        %s565 = sadd.s32 %s564, %s562
        %s566 = smul.addr %s565, 4
        %s567 = scalar_lea.vmem %s13, %s566
        %p568 = pneg %p366
        %p569 = pneg %p363
        %p570 = pneg %p387
        %p571 = pneg %p384
        %p572 = scmp.lt.s32.totalorder %s31, 1
        %s573 = scalar_select %p572, %s31, 1
        %s574 = smul.addr %s573, 4
        %s575 = smul.addr %s574, 8
        %s576 = scalar_lea.vmem %s1, %s575
        %p577 = scmp.lt.s32.totalorder %s31, 1
        %s578 = scalar_select %p577, %s31, 1
        %s579 = smul.addr %s578, 4
        %s580 = smul.addr %s579, 8
        %s581 = scalar_lea.vmem %s2, %s580
        %p582 = scmp.lt.s32.totalorder %s31, 1
        %s583 = scalar_select %p582, %s31, 1
        %p584 = scmp.lt.s32.totalorder %s32, 0
        %s585 = scalar_select %p584, %s32, 0
        %s586 = sadd.s32 %s585, %s583
        %s587 = smul.addr %s586, 4
        %s588 = scalar_lea.vmem %s10, %s587
        %p589 = scmp.lt.s32.totalorder %s31, 1
        %s590 = scalar_select %p589, %s31, 1
        %p591 = scmp.lt.s32.totalorder %s32, 0
        %s592 = scalar_select %p591, %s32, 0
        %s593 = sadd.s32 %s592, %s590
        %s594 = scalar_lea.vmem %s11, %s593
        %p595 = scmp.lt.s32.totalorder %s31, 1
        %s596 = scalar_select %p595, %s31, 1
        %p597 = scmp.lt.s32.totalorder %s32, 0
        %s598 = scalar_select %p597, %s32, 0
        %s599 = sadd.s32 %s598, %s596
        %s600 = smul.addr %s599, 4
        %s601 = scalar_lea.vmem %s12, %s600
        %p602 = scmp.lt.s32.totalorder %s31, 1
        %s603 = scalar_select %p602, %s31, 1
        %p604 = scmp.lt.s32.totalorder %s32, 0
        %s605 = scalar_select %p604, %s32, 0
        %s606 = sadd.s32 %s605, %s603
        %s607 = smul.addr %s606, 4
        %s608 = scalar_lea.vmem %s13, %s607
        %p609 = scmp.eq.s32.totalorder %s31, 0
        %p610 = scmp.eq.s32.totalorder %s32, 0
        %p611 = pnand %p609, %p610
        %p612 = pneg %p611
        // Predicated region
        $region81: #{fused_forward.1} parent=75 // pred_check
          _
        $region82: #{fused_forward.1} parent=75 // pred_check_branch
          %614 = sbr.rel (%p611) target = $region84
        $region83: #{fused_forward.1} parent=75 // pred_region
          %vm615 = vcmask 0
          %616 = vst.msk [vmem:[#allocation3] sm:$0x1] %vm615, 0.0
          %617 = vst.msk [vmem:[#allocation4] sm:$0x1] %vm615, 0.0
          %618 = vst.msk [vmem:[#allocation5] sm:$0x1] %vm615, 0.0
        $region84: #{fused_forward.1} parent=75 // pred_fallthru
          _
        // Predicated region
        $region85: #{fused_forward.1} parent=75 // pred_check
          %p619 = pneg %p610
        $region86: #{fused_forward.1} parent=75 // pred_check_branch
          %621 = sbr.rel (%p619) target = $region88
        $region87: #{fused_forward.1} parent=75 // pred_region
          %v622 = vld [vmem:[%s576] sm:$0xff]
          %v623 = vld [vmem:[%s576 + $0x8] sm:$0xff]
          %v624 = vld [vmem:[%s576 + $0x10] sm:$0xf]
          %v625 = vld [vmem:[%s576 + $0x18] sm:$0xf]
          %v626 = vld [vmem:[%s581] sm:$0xff]
          %v627 = vld [vmem:[%s581 + $0x8] sm:$0xff]
          %v628 = vld [vmem:[%s581 + $0x10] sm:$0xf]
          %v629 = vld [vmem:[%s581 + $0x18] sm:$0xf]
          %v630 = vld [vmem:[%s3] sm:$0xff]
          %v631 = vld [vmem:[%s3 + $0x8] sm:$0xff]
          %v632 = vld [vmem:[%s3 + $0x10] sm:$0xff]
          %v633 = vld [vmem:[%s3 + $0x18] sm:$0xff]
          %v634 = vld [vmem:[%s4] sm:$0xff]
          %v635 = vld [vmem:[%s4 + $0x8] sm:$0xff]
          %v636 = vld [vmem:[%s4 + $0x10] sm:$0xff]
          %v637 = vld [vmem:[%s4 + $0x18] sm:$0xff]
          %639 = vset.pattern.permute.xlu0 0
          %640 = vperm.xlu0 %639, %v634
          %v641 = vpop.permute.xlu0 %640
          %644 = vset.pattern.permute.xlu0 0
          %645 = vperm.xlu0 %644, %v635
          %v646 = vpop.permute.xlu0 %645
          %649 = vset.pattern.permute.xlu0 0
          %650 = vperm.xlu0 %649, %v636
          %v651 = vpop.permute.xlu0 %650
          %654 = vset.pattern.permute.xlu0 0
          %655 = vperm.xlu0 %654, %v637
          %v656 = vpop.permute.xlu0 %655
          %vm658 = vcmask 97280
          %v660 = vsel %vm658, %v630, 0
          %v663 = vsel %vm658, %v631, 0
          %v666 = vsel %vm658, %v632, 0
          %v669 = vsel %vm658, %v633, 0
          %vm671 = vcmask 1043456
          %v673 = vsel %vm671, %v624, 0
          %v676 = vsel %vm671, %v625, 0
          %678 = vmatprep.subr.mxu0 0.0
          %679 = vmatpush1.msra.mxu0 0.0
          %680 = vmatprep.subr.mxu0 0.0
          %681 = vmatpush1.msra.mxu0 0.0
          %682 = vmatprep.subr.mxu0 0.0
          %683 = vmatpush1.msra.mxu0 0.0
          %684 = vmatprep.subr.mxu0 0.0
          %685 = vmatpush1.msra.mxu0 0.0
          %686 = vmatprep.subr.mxu0 0.0
          %687 = vmatpush1.msra.mxu0 0.0
          %688 = vmatprep.subr.mxu0 0.0
          %689 = vmatpush1.msra.mxu0 0.0
          %690 = vmatprep.subr.mxu0 0.0
          %691 = vmatpush1.msra.mxu0 0.0
          %692 = vmatprep.subr.mxu0 0.0
          %693 = vmatpush1.msra.mxu0 0.0
          %694 = vmatprep.subr.mxu0 0.0
          %695 = vmatpush1.msra.mxu0 0.0
          %696 = vmatprep.subr.mxu0 0.0
          %697 = vmatpush1.msra.mxu0 0.0
          %698 = vmatprep.subr.mxu0 0.0
          %699 = vmatpush1.msra.mxu0 0.0
          %700 = vmatprep.subr.mxu0 0.0
          %701 = vmatpush1.msra.mxu0 0.0
          %702 = vmatprep.subr.mxu0 0.0
          %703 = vmatpush1.msra.mxu0 0.0
          %704 = vmatprep.subr.mxu0 0.0
          %705 = vmatpush1.msra.mxu0 0.0
          %706 = vmatprep.subr.mxu0 %v676
          %707 = vmatpush1.msra.mxu0 %v673
          %708 = vmatprep.subr.mxu0 %v623
          %709 = vmatpush1.msra.mxu0 %v622
          %710 = vmatprep.subr.mxu0 0.0
          %711 = vmatpush2.msra.mxu0 0.0
          %712 = vmatprep.subr.mxu0 0.0
          %713 = vmatpush2.msra.mxu0 0.0
          %714 = vmatprep.subr.mxu0 0.0
          %715 = vmatpush2.msra.mxu0 0.0
          %716 = vmatprep.subr.mxu0 0.0
          %717 = vmatpush2.msra.mxu0 0.0
          %718 = vmatprep.subr.mxu0 0.0
          %719 = vmatpush2.msra.mxu0 0.0
          %720 = vmatprep.subr.mxu0 0.0
          %721 = vmatpush2.msra.mxu0 0.0
          %722 = vmatprep.subr.mxu0 0.0
          %723 = vmatpush2.msra.mxu0 0.0
          %724 = vmatprep.subr.mxu0 0.0
          %725 = vmatpush2.msra.mxu0 0.0
          %726 = vmatprep.subr.mxu0 0.0
          %727 = vmatpush2.msra.mxu0 0.0
          %728 = vmatprep.subr.mxu0 0.0
          %729 = vmatpush2.msra.mxu0 0.0
          %730 = vmatprep.subr.mxu0 0.0
          %731 = vmatpush2.msra.mxu0 0.0
          %732 = vmatprep.subr.mxu0 0.0
          %733 = vmatpush2.msra.mxu0 0.0
          %734 = vmatprep.subr.mxu0 0.0
          %735 = vmatpush2.msra.mxu0 0.0
          %736 = vmatprep.subr.mxu0 0.0
          %737 = vmatpush2.msra.mxu0 0.0
          %738 = vmatprep.subr.mxu0 0.0
          %739 = vmatpush2.msra.mxu0 0.0
          %740 = vmatprep.subr.mxu0 0.0
          %741 = vmatpush2.msra.mxu0 0.0
          %742 = vmatprep.mubr.f32.mxu0 0.0
          %743 = vmatmul.mubr.f32.gmra.mxu0 %v660
          %v744 = vpop.f32.mrf.mxu0
          %v745 = vadd.f32 %v641, %v744
          %v746 = vpop.f32.mrf.mxu0
          %v747 = vadd.f32 %v641, %v746
          %748 = vmatprep.mubr.f32.mxu0 0.0
          %749 = vmatmul.mubr.f32.gmra.mxu0 %v663
          %v750 = vpop.f32.mrf.mxu0
          %v751 = vadd.f32 %v646, %v750
          %v752 = vpop.f32.mrf.mxu0
          %v753 = vadd.f32 %v646, %v752
          %754 = vmatprep.mubr.f32.mxu0 0.0
          %755 = vmatmul.mubr.f32.gmra.mxu0 %v666
          %v756 = vpop.f32.mrf.mxu0
          %v757 = vadd.f32 %v651, %v756
          %v758 = vpop.f32.mrf.mxu0
          %v759 = vadd.f32 %v651, %v758
          %760 = vmatprep.mubr.f32.mxu0 0.0
          %761 = vmatmul.mubr.f32.gmra.mxu0 %v669
          %v762 = vpop.f32.mrf.mxu0
          %v763 = vadd.f32 %v656, %v762
          %v764 = vpop.f32.mrf.mxu0
          %v765 = vadd.f32 %v656, %v764
          %766 = vdwg.mxu0
          %v767 = vmax.f32 %v745, 0.0
          %v768 = vmax.f32 %v747, 0.0
          %v769 = vmax.f32 %v751, 0.0
          %v770 = vmax.f32 %v753, 0.0
          %v771 = vmax.f32 %v757, 0.0
          %v772 = vmax.f32 %v759, 0.0
          %v773 = vmax.f32 %v763, 0.0
          %v774 = vmax.f32 %v765, 0.0
          %s775 = scalar_lea.vmem %s3, 32
          %v776 = vld [vmem:[%s775] sm:$0xff]
          %v777 = vld [vmem:[%s775 + $0x8] sm:$0xff]
          %v778 = vld [vmem:[%s775 + $0x10] sm:$0xff]
          %v779 = vld [vmem:[%s775 + $0x18] sm:$0xff]
          %s780 = scalar_lea.vmem %s4, 32
          %v781 = vld [vmem:[%s780] sm:$0xff]
          %v782 = vld [vmem:[%s780 + $0x8] sm:$0xff]
          %v783 = vld [vmem:[%s780 + $0x10] sm:$0xff]
          %v784 = vld [vmem:[%s780 + $0x18] sm:$0xff]
          %786 = vset.pattern.permute.xlu0 0
          %787 = vperm.xlu0 %786, %v781
          %v788 = vpop.permute.xlu0 %787
          %791 = vset.pattern.permute.xlu0 0
          %792 = vperm.xlu0 %791, %v782
          %v793 = vpop.permute.xlu0 %792
          %796 = vset.pattern.permute.xlu0 0
          %797 = vperm.xlu0 %796, %v783
          %v798 = vpop.permute.xlu0 %797
          %801 = vset.pattern.permute.xlu0 0
          %802 = vperm.xlu0 %801, %v784
          %v803 = vpop.permute.xlu0 %802
          %v806 = vsel %vm658, %v776, 0
          %v809 = vsel %vm658, %v777, 0
          %v812 = vsel %vm658, %v778, 0
          %v815 = vsel %vm658, %v779, 0
          %v818 = vsel %vm671, %v628, 0
          %v821 = vsel %vm671, %v629, 0
          %823 = vmatprep.subr.mxu0 0.0
          %824 = vmatpush1.msra.mxu0 0.0
          %825 = vmatprep.subr.mxu0 0.0
          %826 = vmatpush1.msra.mxu0 0.0
          %827 = vmatprep.subr.mxu0 0.0
          %828 = vmatpush1.msra.mxu0 0.0
          %829 = vmatprep.subr.mxu0 0.0
          %830 = vmatpush1.msra.mxu0 0.0
          %831 = vmatprep.subr.mxu0 0.0
          %832 = vmatpush1.msra.mxu0 0.0
          %833 = vmatprep.subr.mxu0 0.0
          %834 = vmatpush1.msra.mxu0 0.0
          %835 = vmatprep.subr.mxu0 0.0
          %836 = vmatpush1.msra.mxu0 0.0
          %837 = vmatprep.subr.mxu0 0.0
          %838 = vmatpush1.msra.mxu0 0.0
          %839 = vmatprep.subr.mxu0 0.0
          %840 = vmatpush1.msra.mxu0 0.0
          %841 = vmatprep.subr.mxu0 0.0
          %842 = vmatpush1.msra.mxu0 0.0
          %843 = vmatprep.subr.mxu0 0.0
          %844 = vmatpush1.msra.mxu0 0.0
          %845 = vmatprep.subr.mxu0 0.0
          %846 = vmatpush1.msra.mxu0 0.0
          %847 = vmatprep.subr.mxu0 0.0
          %848 = vmatpush1.msra.mxu0 0.0
          %849 = vmatprep.subr.mxu0 0.0
          %850 = vmatpush1.msra.mxu0 0.0
          %851 = vmatprep.subr.mxu0 %v821
          %852 = vmatpush1.msra.mxu0 %v818
          %853 = vmatprep.subr.mxu0 %v627
          %854 = vmatpush1.msra.mxu0 %v626
          %855 = vmatprep.subr.mxu0 0.0
          %856 = vmatpush2.msra.mxu0 0.0
          %857 = vmatprep.subr.mxu0 0.0
          %858 = vmatpush2.msra.mxu0 0.0
          %859 = vmatprep.subr.mxu0 0.0
          %860 = vmatpush2.msra.mxu0 0.0
          %861 = vmatprep.subr.mxu0 0.0
          %862 = vmatpush2.msra.mxu0 0.0
          %863 = vmatprep.subr.mxu0 0.0
          %864 = vmatpush2.msra.mxu0 0.0
          %865 = vmatprep.subr.mxu0 0.0
          %866 = vmatpush2.msra.mxu0 0.0
          %867 = vmatprep.subr.mxu0 0.0
          %868 = vmatpush2.msra.mxu0 0.0
          %869 = vmatprep.subr.mxu0 0.0
          %870 = vmatpush2.msra.mxu0 0.0
          %871 = vmatprep.subr.mxu0 0.0
          %872 = vmatpush2.msra.mxu0 0.0
          %873 = vmatprep.subr.mxu0 0.0
          %874 = vmatpush2.msra.mxu0 0.0
          %875 = vmatprep.subr.mxu0 0.0
          %876 = vmatpush2.msra.mxu0 0.0
          %877 = vmatprep.subr.mxu0 0.0
          %878 = vmatpush2.msra.mxu0 0.0
          %879 = vmatprep.subr.mxu0 0.0
          %880 = vmatpush2.msra.mxu0 0.0
          %881 = vmatprep.subr.mxu0 0.0
          %882 = vmatpush2.msra.mxu0 0.0
          %883 = vmatprep.subr.mxu0 0.0
          %884 = vmatpush2.msra.mxu0 0.0
          %885 = vmatprep.subr.mxu0 0.0
          %886 = vmatpush2.msra.mxu0 0.0
          %887 = vmatprep.mubr.f32.mxu0 0.0
          %888 = vmatmul.mubr.f32.gmra.mxu0 %v806
          %v889 = vpop.f32.mrf.mxu0
          %v890 = vadd.f32 %v788, %v889
          %v891 = vpop.f32.mrf.mxu0
          %v892 = vadd.f32 %v788, %v891
          %893 = vmatprep.mubr.f32.mxu0 0.0
          %894 = vmatmul.mubr.f32.gmra.mxu0 %v809
          %v895 = vpop.f32.mrf.mxu0
          %v896 = vadd.f32 %v793, %v895
          %v897 = vpop.f32.mrf.mxu0
          %v898 = vadd.f32 %v793, %v897
          %899 = vmatprep.mubr.f32.mxu0 0.0
          %900 = vmatmul.mubr.f32.gmra.mxu0 %v812
          %v901 = vpop.f32.mrf.mxu0
          %v902 = vadd.f32 %v798, %v901
          %v903 = vpop.f32.mrf.mxu0
          %v904 = vadd.f32 %v798, %v903
          %905 = vmatprep.mubr.f32.mxu0 0.0
          %906 = vmatmul.mubr.f32.gmra.mxu0 %v815
          %v907 = vpop.f32.mrf.mxu0
          %v908 = vadd.f32 %v803, %v907
          %v909 = vpop.f32.mrf.mxu0
          %v910 = vadd.f32 %v803, %v909
          %911 = vdwg.mxu0
          %v912 = vmax.f32 %v890, 0.0
          %v913 = vmax.f32 %v892, 0.0
          %v914 = vmax.f32 %v896, 0.0
          %v915 = vmax.f32 %v898, 0.0
          %v916 = vmax.f32 %v902, 0.0
          %v917 = vmax.f32 %v904, 0.0
          %v918 = vmax.f32 %v908, 0.0
          %v919 = vmax.f32 %v910, 0.0
          %v920 = vadd.f32 %v767, %v768
          %921 = vadd.xlane.f32.xlu0 %v920
          %v922 = vpop.xlane.xlu0 %921
          %v923 = vadd.f32 %v769, %v770
          %924 = vadd.xlane.f32.xlu0 %v923
          %v925 = vpop.xlane.xlu0 %924
          %v926 = vadd.f32 %v771, %v772
          %927 = vadd.xlane.f32.xlu0 %v926
          %v928 = vpop.xlane.xlu0 %927
          %v929 = vadd.f32 %v773, %v774
          %930 = vadd.xlane.f32.xlu0 %v929
          %v931 = vpop.xlane.xlu0 %930
          %v932 = vrcp.pop 256.0
          %v933 = vmul.f32 %v922, %v932
          %v934 = vmul.f32 %v925, %v932
          %v935 = vmul.f32 %v928, %v932
          %v936 = vmul.f32 %v931, %v932
          %v937 = vadd.f32 %v912, %v913
          %938 = vadd.xlane.f32.xlu0 %v937
          %v939 = vpop.xlane.xlu0 %938
          %v940 = vadd.f32 %v914, %v915
          %941 = vadd.xlane.f32.xlu0 %v940
          %v942 = vpop.xlane.xlu0 %941
          %v943 = vadd.f32 %v916, %v917
          %944 = vadd.xlane.f32.xlu0 %v943
          %v945 = vpop.xlane.xlu0 %944
          %v946 = vadd.f32 %v918, %v919
          %947 = vadd.xlane.f32.xlu0 %v946
          %v948 = vpop.xlane.xlu0 %947
          %v949 = vmul.f32 %v939, %v932
          %v950 = vmul.f32 %v942, %v932
          %v951 = vmul.f32 %v945, %v932
          %v952 = vmul.f32 %v948, %v932
          %v953 = vld [vmem:[%s6] sm:$0xff]
          %v954 = vld [vmem:[%s6 + $0x8] sm:$0xff]
          %v955 = vld [vmem:[%s6 + $0x10] sm:$0xff]
          %v956 = vld [vmem:[%s6 + $0x18] sm:$0xff]
          %v957 = vld [vmem:[%s6 + $0x20] sm:$0xff]
          %v958 = vld [vmem:[%s6 + $0x28] sm:$0xff]
          %v959 = vld [vmem:[%s6 + $0x30] sm:$0xff]
          %v960 = vld [vmem:[%s6 + $0x38] sm:$0xff]
          %v961 = vld [vmem:[%s6 + $0x40] sm:$0xff]
          %v962 = vld [vmem:[%s6 + $0x48] sm:$0xff]
          %v963 = vld [vmem:[%s6 + $0x50] sm:$0xff]
          %v964 = vld [vmem:[%s6 + $0x58] sm:$0xff]
          %v965 = vld [vmem:[%s6 + $0x60] sm:$0xff]
          %v966 = vld [vmem:[%s6 + $0x68] sm:$0xff]
          %v967 = vld [vmem:[%s6 + $0x70] sm:$0xff]
          %v968 = vld [vmem:[%s6 + $0x78] sm:$0xff]
          %985 = vrot.lane.b32.xlu0 %v953, 96
          %v986 = vpop.permute.xlu0 %985
          %987 = vrot.lane.b32.xlu0 %v954, 96
          %v988 = vpop.permute.xlu0 %987
          %989 = vrot.lane.b32.xlu0 %v955, 96
          %v990 = vpop.permute.xlu0 %989
          %991 = vrot.lane.b32.xlu0 %v956, 96
          %v992 = vpop.permute.xlu0 %991
          %993 = vrot.lane.b32.xlu0 %v957, 96
          %v994 = vpop.permute.xlu0 %993
          %995 = vrot.lane.b32.xlu0 %v958, 96
          %v996 = vpop.permute.xlu0 %995
          %997 = vrot.lane.b32.xlu0 %v959, 96
          %v998 = vpop.permute.xlu0 %997
          %999 = vrot.lane.b32.xlu0 %v960, 96
          %v1000 = vpop.permute.xlu0 %999
          %1001 = vrot.lane.b32.xlu0 %v961, 96
          %v1002 = vpop.permute.xlu0 %1001
          %1003 = vrot.lane.b32.xlu0 %v962, 96
          %v1004 = vpop.permute.xlu0 %1003
          %1005 = vrot.lane.b32.xlu0 %v963, 96
          %v1006 = vpop.permute.xlu0 %1005
          %1007 = vrot.lane.b32.xlu0 %v964, 96
          %v1008 = vpop.permute.xlu0 %1007
          %1009 = vrot.lane.b32.xlu0 %v965, 96
          %v1010 = vpop.permute.xlu0 %1009
          %1011 = vrot.lane.b32.xlu0 %v966, 96
          %v1012 = vpop.permute.xlu0 %1011
          %1013 = vrot.lane.b32.xlu0 %v967, 96
          %v1014 = vpop.permute.xlu0 %1013
          %1015 = vrot.lane.b32.xlu0 %v968, 96
          %v1016 = vpop.permute.xlu0 %1015
          %vm1017 = vcmask 261120
          %v1018 = vsel %vm1017, %v986, 0
          %v1020 = vsel %vm1017, %v988, 0
          %v1022 = vsel %vm1017, %v990, 0
          %v1024 = vsel %vm1017, %v992, 0
          %v1026 = vsel %vm1017, %v994, 0
          %v1028 = vsel %vm1017, %v996, 0
          %v1030 = vsel %vm1017, %v998, 0
          %v1032 = vsel %vm1017, %v1000, 0
          %v1034 = vsel %vm1017, %v1002, 0
          %v1036 = vsel %vm1017, %v1004, 0
          %v1038 = vsel %vm1017, %v1006, 0
          %v1040 = vsel %vm1017, %v1008, 0
          %v1042 = vsel %vm1017, %v1010, 0
          %v1044 = vsel %vm1017, %v1012, 0
          %v1046 = vsel %vm1017, %v1014, 0
          %v1048 = vsel %vm1017, %v1016, 0
          %1050 = vmatprep.subr.mxu0 0.0
          %1051 = vmatpush1.msra.mxu0 0.0
          %1052 = vmatprep.subr.mxu0 0.0
          %1053 = vmatpush1.msra.mxu0 0.0
          %1054 = vmatprep.subr.mxu0 0.0
          %1055 = vmatpush1.msra.mxu0 0.0
          %1056 = vmatprep.subr.mxu0 0.0
          %1057 = vmatpush1.msra.mxu0 0.0
          %1058 = vmatprep.subr.mxu0 0.0
          %1059 = vmatpush1.msra.mxu0 0.0
          %1060 = vmatprep.subr.mxu0 0.0
          %1061 = vmatpush1.msra.mxu0 0.0
          %1062 = vmatprep.subr.mxu0 0.0
          %1063 = vmatpush1.msra.mxu0 0.0
          %1064 = vmatprep.subr.mxu0 0.0
          %1065 = vmatpush1.msra.mxu0 0.0
          %1066 = vmatprep.subr.mxu0 0.0
          %1067 = vmatpush1.msra.mxu0 0.0
          %1068 = vmatprep.subr.mxu0 0.0
          %1069 = vmatpush1.msra.mxu0 0.0
          %1070 = vmatprep.subr.mxu0 0.0
          %1071 = vmatpush1.msra.mxu0 0.0
          %1072 = vmatprep.subr.mxu0 0.0
          %1073 = vmatpush1.msra.mxu0 0.0
          %1074 = vmatprep.subr.mxu0 0.0
          %1075 = vmatpush1.msra.mxu0 %v952
          %1076 = vmatprep.subr.mxu0 0.0
          %1077 = vmatpush1.msra.mxu0 %v951
          %1078 = vmatprep.subr.mxu0 0.0
          %1079 = vmatpush1.msra.mxu0 %v950
          %1080 = vmatprep.subr.mxu0 0.0
          %1081 = vmatpush1.msra.mxu0 %v949
          %1082 = vmatprep.subr.mxu0 0.0
          %1083 = vmatpush2.msra.mxu0 0.0
          %1084 = vmatprep.subr.mxu0 0.0
          %1085 = vmatpush2.msra.mxu0 0.0
          %1086 = vmatprep.subr.mxu0 0.0
          %1087 = vmatpush2.msra.mxu0 0.0
          %1088 = vmatprep.subr.mxu0 0.0
          %1089 = vmatpush2.msra.mxu0 0.0
          %1090 = vmatprep.subr.mxu0 0.0
          %1091 = vmatpush2.msra.mxu0 0.0
          %1092 = vmatprep.subr.mxu0 0.0
          %1093 = vmatpush2.msra.mxu0 0.0
          %1094 = vmatprep.subr.mxu0 0.0
          %1095 = vmatpush2.msra.mxu0 0.0
          %1096 = vmatprep.subr.mxu0 0.0
          %1097 = vmatpush2.msra.mxu0 0.0
          %1098 = vmatprep.subr.mxu0 0.0
          %1099 = vmatpush2.msra.mxu0 0.0
          %1100 = vmatprep.subr.mxu0 0.0
          %1101 = vmatpush2.msra.mxu0 0.0
          %1102 = vmatprep.subr.mxu0 0.0
          %1103 = vmatpush2.msra.mxu0 0.0
          %1104 = vmatprep.subr.mxu0 0.0
          %1105 = vmatpush2.msra.mxu0 0.0
          %1106 = vmatprep.subr.mxu0 0.0
          %1107 = vmatpush2.msra.mxu0 0.0
          %1108 = vmatprep.subr.mxu0 0.0
          %1109 = vmatpush2.msra.mxu0 0.0
          %1110 = vmatprep.subr.mxu0 0.0
          %1111 = vmatpush2.msra.mxu0 0.0
          %1112 = vmatprep.subr.mxu0 0.0
          %1113 = vmatpush2.msra.mxu0 0.0
          %1114 = vmatprep.mubr.f32.mxu0 0.0
          %1115 = vmatmul.mubr.f32.gmra.mxu0 %v1018
          %v1116 = vpop.f32.mrf.mxu0
          %v1117 = vadd.f32 0.0, %v1116
          %v1118 = vpop.f32.mrf.mxu0
          %1119 = vmatprep.mubr.f32.mxu0 0.0
          %1120 = vmatmul.mubr.f32.gmra.mxu0 %v1020
          %v1121 = vpop.f32.mrf.mxu0
          %v1122 = vadd.f32 0.0, %v1121
          %v1123 = vpop.f32.mrf.mxu0
          %1124 = vmatprep.mubr.f32.mxu0 0.0
          %1125 = vmatmul.mubr.f32.gmra.mxu0 %v1022
          %v1126 = vpop.f32.mrf.mxu0
          %v1127 = vadd.f32 0.0, %v1126
          %v1128 = vpop.f32.mrf.mxu0
          %1129 = vmatprep.mubr.f32.mxu0 0.0
          %1130 = vmatmul.mubr.f32.gmra.mxu0 %v1024
          %v1131 = vpop.f32.mrf.mxu0
          %v1132 = vadd.f32 0.0, %v1131
          %v1133 = vpop.f32.mrf.mxu0
          %1134 = vmatprep.mubr.f32.mxu0 0.0
          %1135 = vmatmul.mubr.f32.gmra.mxu0 %v1026
          %v1136 = vpop.f32.mrf.mxu0
          %v1137 = vadd.f32 0.0, %v1136
          %v1138 = vpop.f32.mrf.mxu0
          %1139 = vmatprep.mubr.f32.mxu0 0.0
          %1140 = vmatmul.mubr.f32.gmra.mxu0 %v1028
          %v1141 = vpop.f32.mrf.mxu0
          %v1142 = vadd.f32 0.0, %v1141
          %v1143 = vpop.f32.mrf.mxu0
          %1144 = vmatprep.mubr.f32.mxu0 0.0
          %1145 = vmatmul.mubr.f32.gmra.mxu0 %v1030
          %v1146 = vpop.f32.mrf.mxu0
          %v1147 = vadd.f32 0.0, %v1146
          %v1148 = vpop.f32.mrf.mxu0
          %1149 = vmatprep.mubr.f32.mxu0 0.0
          %1150 = vmatmul.mubr.f32.gmra.mxu0 %v1032
          %v1151 = vpop.f32.mrf.mxu0
          %v1152 = vadd.f32 0.0, %v1151
          %v1153 = vpop.f32.mrf.mxu0
          %1154 = vmatprep.mubr.f32.mxu0 0.0
          %1155 = vmatmul.mubr.f32.gmra.mxu0 %v1034
          %v1156 = vpop.f32.mrf.mxu0
          %v1157 = vadd.f32 0.0, %v1156
          %v1158 = vpop.f32.mrf.mxu0
          %1159 = vmatprep.mubr.f32.mxu0 0.0
          %1160 = vmatmul.mubr.f32.gmra.mxu0 %v1036
          %v1161 = vpop.f32.mrf.mxu0
          %v1162 = vadd.f32 0.0, %v1161
          %v1163 = vpop.f32.mrf.mxu0
          %1164 = vmatprep.mubr.f32.mxu0 0.0
          %1165 = vmatmul.mubr.f32.gmra.mxu0 %v1038
          %v1166 = vpop.f32.mrf.mxu0
          %v1167 = vadd.f32 0.0, %v1166
          %v1168 = vpop.f32.mrf.mxu0
          %1169 = vmatprep.mubr.f32.mxu0 0.0
          %1170 = vmatmul.mubr.f32.gmra.mxu0 %v1040
          %v1171 = vpop.f32.mrf.mxu0
          %v1172 = vadd.f32 0.0, %v1171
          %v1173 = vpop.f32.mrf.mxu0
          %1174 = vmatprep.mubr.f32.mxu0 0.0
          %1175 = vmatmul.mubr.f32.gmra.mxu0 %v1042
          %v1176 = vpop.f32.mrf.mxu0
          %v1177 = vadd.f32 0.0, %v1176
          %v1178 = vpop.f32.mrf.mxu0
          %1179 = vmatprep.mubr.f32.mxu0 0.0
          %1180 = vmatmul.mubr.f32.gmra.mxu0 %v1044
          %v1181 = vpop.f32.mrf.mxu0
          %v1182 = vadd.f32 0.0, %v1181
          %v1183 = vpop.f32.mrf.mxu0
          %1184 = vmatprep.mubr.f32.mxu0 0.0
          %1185 = vmatmul.mubr.f32.gmra.mxu0 %v1046
          %v1186 = vpop.f32.mrf.mxu0
          %v1187 = vadd.f32 0.0, %v1186
          %v1188 = vpop.f32.mrf.mxu0
          %1189 = vmatprep.mubr.f32.mxu0 0.0
          %1190 = vmatmul.mubr.f32.gmra.mxu0 %v1048
          %v1191 = vpop.f32.mrf.mxu0
          %v1192 = vadd.f32 0.0, %v1191
          %v1193 = vpop.f32.mrf.mxu0
          %1194 = vdwg.mxu0
          %v1195 = vsel %vm1017, %v953, 0
          %v1197 = vsel %vm1017, %v954, 0
          %v1199 = vsel %vm1017, %v955, 0
          %v1201 = vsel %vm1017, %v956, 0
          %v1203 = vsel %vm1017, %v957, 0
          %v1205 = vsel %vm1017, %v958, 0
          %v1207 = vsel %vm1017, %v959, 0
          %v1209 = vsel %vm1017, %v960, 0
          %v1211 = vsel %vm1017, %v961, 0
          %v1213 = vsel %vm1017, %v962, 0
          %v1215 = vsel %vm1017, %v963, 0
          %v1217 = vsel %vm1017, %v964, 0
          %v1219 = vsel %vm1017, %v965, 0
          %v1221 = vsel %vm1017, %v966, 0
          %v1223 = vsel %vm1017, %v967, 0
          %v1225 = vsel %vm1017, %v968, 0
          %1227 = vmatprep.subr.mxu0 0.0
          %1228 = vmatpush1.msra.mxu0 0.0
          %1229 = vmatprep.subr.mxu0 0.0
          %1230 = vmatpush1.msra.mxu0 0.0
          %1231 = vmatprep.subr.mxu0 0.0
          %1232 = vmatpush1.msra.mxu0 0.0
          %1233 = vmatprep.subr.mxu0 0.0
          %1234 = vmatpush1.msra.mxu0 0.0
          %1235 = vmatprep.subr.mxu0 0.0
          %1236 = vmatpush1.msra.mxu0 0.0
          %1237 = vmatprep.subr.mxu0 0.0
          %1238 = vmatpush1.msra.mxu0 0.0
          %1239 = vmatprep.subr.mxu0 0.0
          %1240 = vmatpush1.msra.mxu0 0.0
          %1241 = vmatprep.subr.mxu0 0.0
          %1242 = vmatpush1.msra.mxu0 0.0
          %1243 = vmatprep.subr.mxu0 0.0
          %1244 = vmatpush1.msra.mxu0 0.0
          %1245 = vmatprep.subr.mxu0 0.0
          %1246 = vmatpush1.msra.mxu0 0.0
          %1247 = vmatprep.subr.mxu0 0.0
          %1248 = vmatpush1.msra.mxu0 0.0
          %1249 = vmatprep.subr.mxu0 0.0
          %1250 = vmatpush1.msra.mxu0 0.0
          %1251 = vmatprep.subr.mxu0 0.0
          %1252 = vmatpush1.msra.mxu0 %v936
          %1253 = vmatprep.subr.mxu0 0.0
          %1254 = vmatpush1.msra.mxu0 %v935
          %1255 = vmatprep.subr.mxu0 0.0
          %1256 = vmatpush1.msra.mxu0 %v934
          %1257 = vmatprep.subr.mxu0 0.0
          %1258 = vmatpush1.msra.mxu0 %v933
          %1259 = vmatprep.subr.mxu0 0.0
          %1260 = vmatpush2.msra.mxu0 0.0
          %1261 = vmatprep.subr.mxu0 0.0
          %1262 = vmatpush2.msra.mxu0 0.0
          %1263 = vmatprep.subr.mxu0 0.0
          %1264 = vmatpush2.msra.mxu0 0.0
          %1265 = vmatprep.subr.mxu0 0.0
          %1266 = vmatpush2.msra.mxu0 0.0
          %1267 = vmatprep.subr.mxu0 0.0
          %1268 = vmatpush2.msra.mxu0 0.0
          %1269 = vmatprep.subr.mxu0 0.0
          %1270 = vmatpush2.msra.mxu0 0.0
          %1271 = vmatprep.subr.mxu0 0.0
          %1272 = vmatpush2.msra.mxu0 0.0
          %1273 = vmatprep.subr.mxu0 0.0
          %1274 = vmatpush2.msra.mxu0 0.0
          %1275 = vmatprep.subr.mxu0 0.0
          %1276 = vmatpush2.msra.mxu0 0.0
          %1277 = vmatprep.subr.mxu0 0.0
          %1278 = vmatpush2.msra.mxu0 0.0
          %1279 = vmatprep.subr.mxu0 0.0
          %1280 = vmatpush2.msra.mxu0 0.0
          %1281 = vmatprep.subr.mxu0 0.0
          %1282 = vmatpush2.msra.mxu0 0.0
          %1283 = vmatprep.subr.mxu0 0.0
          %1284 = vmatpush2.msra.mxu0 0.0
          %1285 = vmatprep.subr.mxu0 0.0
          %1286 = vmatpush2.msra.mxu0 0.0
          %1287 = vmatprep.subr.mxu0 0.0
          %1288 = vmatpush2.msra.mxu0 0.0
          %1289 = vmatprep.subr.mxu0 0.0
          %1290 = vmatpush2.msra.mxu0 0.0
          %1291 = vmatprep.mubr.f32.mxu0 0.0
          %1292 = vmatmul.mubr.f32.gmra.mxu0 %v1195
          %v1293 = vpop.f32.mrf.mxu0
          %v1294 = vadd.f32 %v1117, %v1293
          %v1295 = vpop.f32.mrf.mxu0
          %1296 = vmatprep.mubr.f32.mxu0 0.0
          %1297 = vmatmul.mubr.f32.gmra.mxu0 %v1197
          %v1298 = vpop.f32.mrf.mxu0
          %v1299 = vadd.f32 %v1122, %v1298
          %v1300 = vpop.f32.mrf.mxu0
          %1301 = vmatprep.mubr.f32.mxu0 0.0
          %1302 = vmatmul.mubr.f32.gmra.mxu0 %v1199
          %v1303 = vpop.f32.mrf.mxu0
          %v1304 = vadd.f32 %v1127, %v1303
          %v1305 = vpop.f32.mrf.mxu0
          %1306 = vmatprep.mubr.f32.mxu0 0.0
          %1307 = vmatmul.mubr.f32.gmra.mxu0 %v1201
          %v1308 = vpop.f32.mrf.mxu0
          %v1309 = vadd.f32 %v1132, %v1308
          %v1310 = vpop.f32.mrf.mxu0
          %1311 = vmatprep.mubr.f32.mxu0 0.0
          %1312 = vmatmul.mubr.f32.gmra.mxu0 %v1203
          %v1313 = vpop.f32.mrf.mxu0
          %v1314 = vadd.f32 %v1137, %v1313
          %v1315 = vpop.f32.mrf.mxu0
          %1316 = vmatprep.mubr.f32.mxu0 0.0
          %1317 = vmatmul.mubr.f32.gmra.mxu0 %v1205
          %v1318 = vpop.f32.mrf.mxu0
          %v1319 = vadd.f32 %v1142, %v1318
          %v1320 = vpop.f32.mrf.mxu0
          %1321 = vmatprep.mubr.f32.mxu0 0.0
          %1322 = vmatmul.mubr.f32.gmra.mxu0 %v1207
          %v1323 = vpop.f32.mrf.mxu0
          %v1324 = vadd.f32 %v1147, %v1323
          %v1325 = vpop.f32.mrf.mxu0
          %1326 = vmatprep.mubr.f32.mxu0 0.0
          %1327 = vmatmul.mubr.f32.gmra.mxu0 %v1209
          %v1328 = vpop.f32.mrf.mxu0
          %v1329 = vadd.f32 %v1152, %v1328
          %v1330 = vpop.f32.mrf.mxu0
          %1331 = vmatprep.mubr.f32.mxu0 0.0
          %1332 = vmatmul.mubr.f32.gmra.mxu0 %v1211
          %v1333 = vpop.f32.mrf.mxu0
          %v1334 = vadd.f32 %v1157, %v1333
          %v1335 = vpop.f32.mrf.mxu0
          %1336 = vmatprep.mubr.f32.mxu0 0.0
          %1337 = vmatmul.mubr.f32.gmra.mxu0 %v1213
          %v1338 = vpop.f32.mrf.mxu0
          %v1339 = vadd.f32 %v1162, %v1338
          %v1340 = vpop.f32.mrf.mxu0
          %1341 = vmatprep.mubr.f32.mxu0 0.0
          %1342 = vmatmul.mubr.f32.gmra.mxu0 %v1215
          %v1343 = vpop.f32.mrf.mxu0
          %v1344 = vadd.f32 %v1167, %v1343
          %v1345 = vpop.f32.mrf.mxu0
          %1346 = vmatprep.mubr.f32.mxu0 0.0
          %1347 = vmatmul.mubr.f32.gmra.mxu0 %v1217
          %v1348 = vpop.f32.mrf.mxu0
          %v1349 = vadd.f32 %v1172, %v1348
          %v1350 = vpop.f32.mrf.mxu0
          %1351 = vmatprep.mubr.f32.mxu0 0.0
          %1352 = vmatmul.mubr.f32.gmra.mxu0 %v1219
          %v1353 = vpop.f32.mrf.mxu0
          %v1354 = vadd.f32 %v1177, %v1353
          %v1355 = vpop.f32.mrf.mxu0
          %1356 = vmatprep.mubr.f32.mxu0 0.0
          %1357 = vmatmul.mubr.f32.gmra.mxu0 %v1221
          %v1358 = vpop.f32.mrf.mxu0
          %v1359 = vadd.f32 %v1182, %v1358
          %v1360 = vpop.f32.mrf.mxu0
          %1361 = vmatprep.mubr.f32.mxu0 0.0
          %1362 = vmatmul.mubr.f32.gmra.mxu0 %v1223
          %v1363 = vpop.f32.mrf.mxu0
          %v1364 = vadd.f32 %v1187, %v1363
          %v1365 = vpop.f32.mrf.mxu0
          %1366 = vmatprep.mubr.f32.mxu0 0.0
          %1367 = vmatmul.mubr.f32.gmra.mxu0 %v1225
          %v1368 = vpop.f32.mrf.mxu0
          %v1369 = vadd.f32 %v1192, %v1368
          %v1370 = vpop.f32.mrf.mxu0
          %1371 = vdwg.mxu0
          %v1372 = vld [vmem:[%s7] sm:$0xff]
          %v1373 = vld [vmem:[%s7 + $0x8] sm:$0xff]
          %v1374 = vld [vmem:[%s7 + $0x10] sm:$0xff]
          %v1375 = vld [vmem:[%s7 + $0x18] sm:$0xff]
          %v1376 = vld [vmem:[%s7 + $0x20] sm:$0xff]
          %v1377 = vld [vmem:[%s7 + $0x28] sm:$0xff]
          %v1378 = vld [vmem:[%s7 + $0x30] sm:$0xff]
          %v1379 = vld [vmem:[%s7 + $0x38] sm:$0xff]
          %v1380 = vld [vmem:[%s7 + $0x40] sm:$0xff]
          %v1381 = vld [vmem:[%s7 + $0x48] sm:$0xff]
          %v1382 = vld [vmem:[%s7 + $0x50] sm:$0xff]
          %v1383 = vld [vmem:[%s7 + $0x58] sm:$0xff]
          %v1384 = vld [vmem:[%s7 + $0x60] sm:$0xff]
          %v1385 = vld [vmem:[%s7 + $0x68] sm:$0xff]
          %v1386 = vld [vmem:[%s7 + $0x70] sm:$0xff]
          %v1387 = vld [vmem:[%s7 + $0x78] sm:$0xff]
          %v1388 = vadd.f32 %v1294, %v1372
          %v1389 = vadd.f32 %v1299, %v1373
          %v1390 = vadd.f32 %v1304, %v1374
          %v1391 = vadd.f32 %v1309, %v1375
          %v1392 = vadd.f32 %v1314, %v1376
          %v1393 = vadd.f32 %v1319, %v1377
          %v1394 = vadd.f32 %v1324, %v1378
          %v1395 = vadd.f32 %v1329, %v1379
          %v1396 = vadd.f32 %v1334, %v1380
          %v1397 = vadd.f32 %v1339, %v1381
          %v1398 = vadd.f32 %v1344, %v1382
          %v1399 = vadd.f32 %v1349, %v1383
          %v1400 = vadd.f32 %v1354, %v1384
          %v1401 = vadd.f32 %v1359, %v1385
          %v1402 = vadd.f32 %v1364, %v1386
          %v1403 = vadd.f32 %v1369, %v1387
          %vm1404 = vcmask 7168
          %1405 = vst.msk [vmem:[#allocation2] sm:$0xff] %vm1404, %v1388
          %1406 = vst.msk [vmem:[#allocation2 + $0x8] sm:$0xff] %vm1404, %v1389
          %1407 = vst.msk [vmem:[#allocation2 + $0x10] sm:$0xff] %vm1404, %v1390
          %1408 = vst.msk [vmem:[#allocation2 + $0x18] sm:$0xff] %vm1404, %v1391
          %1409 = vst.msk [vmem:[#allocation2 + $0x20] sm:$0xff] %vm1404, %v1392
          %1410 = vst.msk [vmem:[#allocation2 + $0x28] sm:$0xff] %vm1404, %v1393
          %1411 = vst.msk [vmem:[#allocation2 + $0x30] sm:$0xff] %vm1404, %v1394
          %1412 = vst.msk [vmem:[#allocation2 + $0x38] sm:$0xff] %vm1404, %v1395
          %1413 = vst.msk [vmem:[#allocation2 + $0x40] sm:$0xff] %vm1404, %v1396
          %1414 = vst.msk [vmem:[#allocation2 + $0x48] sm:$0xff] %vm1404, %v1397
          %1415 = vst.msk [vmem:[#allocation2 + $0x50] sm:$0xff] %vm1404, %v1398
          %1416 = vst.msk [vmem:[#allocation2 + $0x58] sm:$0xff] %vm1404, %v1399
          %1417 = vst.msk [vmem:[#allocation2 + $0x60] sm:$0xff] %vm1404, %v1400
          %1418 = vst.msk [vmem:[#allocation2 + $0x68] sm:$0xff] %vm1404, %v1401
          %1419 = vst.msk [vmem:[#allocation2 + $0x70] sm:$0xff] %vm1404, %v1402
          %1420 = vst.msk [vmem:[#allocation2 + $0x78] sm:$0xff] %vm1404, %v1403
        $region88: #{fused_forward.1} parent=75 // pred_fallthru
          _
        %v1421 = vld [vmem:[%s588] sm:$0x7]
        %v1422 = vld [vmem:[%s5] sm:$0xff]
        %v1423 = vld [vmem:[%s5 + $0x8] sm:$0xff]
        %v1424 = vld [vmem:[%s5 + $0x10] sm:$0xff]
        %v1425 = vld [vmem:[%s5 + $0x18] sm:$0xff]
        %v1426 = vld [vmem:[%s5 + $0x20] sm:$0xff]
        %v1427 = vld [vmem:[%s5 + $0x28] sm:$0xff]
        %v1428 = vld [vmem:[%s5 + $0x30] sm:$0xff]
        %v1429 = vld [vmem:[%s5 + $0x38] sm:$0xff]
        %v1430 = vld [vmem:[%s5 + $0x40] sm:$0xff]
        %v1431 = vld [vmem:[%s5 + $0x48] sm:$0xff]
        %v1432 = vld [vmem:[%s5 + $0x50] sm:$0xff]
        %v1433 = vld [vmem:[%s5 + $0x58] sm:$0xff]
        %v1434 = vld [vmem:[%s5 + $0x60] sm:$0xff]
        %v1435 = vld [vmem:[%s5 + $0x68] sm:$0xff]
        %v1436 = vld [vmem:[%s5 + $0x70] sm:$0xff]
        %v1437 = vld [vmem:[%s5 + $0x78] sm:$0xff]
        %1439 = vset.pattern.permute.xlu0 0
        %1440 = vperm.xlu0 %1439, %v1422
        %v1441 = vpop.permute.xlu0 %1440
        %1444 = vset.pattern.permute.xlu0 0
        %1445 = vperm.xlu0 %1444, %v1423
        %v1446 = vpop.permute.xlu0 %1445
        %1449 = vset.pattern.permute.xlu0 0
        %1450 = vperm.xlu0 %1449, %v1424
        %v1451 = vpop.permute.xlu0 %1450
        %1454 = vset.pattern.permute.xlu0 0
        %1455 = vperm.xlu0 %1454, %v1425
        %v1456 = vpop.permute.xlu0 %1455
        %1459 = vset.pattern.permute.xlu0 0
        %1460 = vperm.xlu0 %1459, %v1426
        %v1461 = vpop.permute.xlu0 %1460
        %1464 = vset.pattern.permute.xlu0 0
        %1465 = vperm.xlu0 %1464, %v1427
        %v1466 = vpop.permute.xlu0 %1465
        %1469 = vset.pattern.permute.xlu0 0
        %1470 = vperm.xlu0 %1469, %v1428
        %v1471 = vpop.permute.xlu0 %1470
        %1474 = vset.pattern.permute.xlu0 0
        %1475 = vperm.xlu0 %1474, %v1429
        %v1476 = vpop.permute.xlu0 %1475
        %1479 = vset.pattern.permute.xlu0 0
        %1480 = vperm.xlu0 %1479, %v1430
        %v1481 = vpop.permute.xlu0 %1480
        %1484 = vset.pattern.permute.xlu0 0
        %1485 = vperm.xlu0 %1484, %v1431
        %v1486 = vpop.permute.xlu0 %1485
        %1489 = vset.pattern.permute.xlu0 0
        %1490 = vperm.xlu0 %1489, %v1432
        %v1491 = vpop.permute.xlu0 %1490
        %1494 = vset.pattern.permute.xlu0 0
        %1495 = vperm.xlu0 %1494, %v1433
        %v1496 = vpop.permute.xlu0 %1495
        %1499 = vset.pattern.permute.xlu0 0
        %1500 = vperm.xlu0 %1499, %v1434
        %v1501 = vpop.permute.xlu0 %1500
        %1504 = vset.pattern.permute.xlu0 0
        %1505 = vperm.xlu0 %1504, %v1435
        %v1506 = vpop.permute.xlu0 %1505
        %1509 = vset.pattern.permute.xlu0 0
        %1510 = vperm.xlu0 %1509, %v1436
        %v1511 = vpop.permute.xlu0 %1510
        %1514 = vset.pattern.permute.xlu0 0
        %1515 = vperm.xlu0 %1514, %v1437
        %v1516 = vpop.permute.xlu0 %1515
        %v1518 = vlaneseq
        %v1519 = vshrl.u32 %v1518, 7
        %v1520 = vsub.s32 0, %v1519
        %v1521 = vrot.slane %v1421, %v1520
        %v1522 = vmul.f32 %v1441, %v1521
        %v1523 = vmul.f32 %v1446, %v1521
        %v1524 = vmul.f32 %v1451, %v1521
        %v1525 = vmul.f32 %v1456, %v1521
        %v1526 = vmul.f32 %v1461, %v1521
        %v1527 = vmul.f32 %v1466, %v1521
        %v1528 = vmul.f32 %v1471, %v1521
        %v1529 = vmul.f32 %v1476, %v1521
        %v1530 = vmul.f32 %v1481, %v1521
        %v1531 = vmul.f32 %v1486, %v1521
        %v1532 = vmul.f32 %v1491, %v1521
        %v1533 = vmul.f32 %v1496, %v1521
        %v1534 = vmul.f32 %v1501, %v1521
        %v1535 = vmul.f32 %v1506, %v1521
        %v1536 = vmul.f32 %v1511, %v1521
        %v1537 = vmul.f32 %v1516, %v1521
        %1538 = vset.pattern.permute.xlu0 1
        %1539 = vperm.xlu0 %1538, %v1422
        %v1540 = vpop.permute.xlu0 %1539
        %1542 = vset.pattern.permute.xlu0 1
        %1543 = vperm.xlu0 %1542, %v1423
        %v1544 = vpop.permute.xlu0 %1543
        %1546 = vset.pattern.permute.xlu0 1
        %1547 = vperm.xlu0 %1546, %v1424
        %v1548 = vpop.permute.xlu0 %1547
        %1550 = vset.pattern.permute.xlu0 1
        %1551 = vperm.xlu0 %1550, %v1425
        %v1552 = vpop.permute.xlu0 %1551
        %1554 = vset.pattern.permute.xlu0 1
        %1555 = vperm.xlu0 %1554, %v1426
        %v1556 = vpop.permute.xlu0 %1555
        %1558 = vset.pattern.permute.xlu0 1
        %1559 = vperm.xlu0 %1558, %v1427
        %v1560 = vpop.permute.xlu0 %1559
        %1562 = vset.pattern.permute.xlu0 1
        %1563 = vperm.xlu0 %1562, %v1428
        %v1564 = vpop.permute.xlu0 %1563
        %1566 = vset.pattern.permute.xlu0 1
        %1567 = vperm.xlu0 %1566, %v1429
        %v1568 = vpop.permute.xlu0 %1567
        %1570 = vset.pattern.permute.xlu0 1
        %1571 = vperm.xlu0 %1570, %v1430
        %v1572 = vpop.permute.xlu0 %1571
        %1574 = vset.pattern.permute.xlu0 1
        %1575 = vperm.xlu0 %1574, %v1431
        %v1576 = vpop.permute.xlu0 %1575
        %1578 = vset.pattern.permute.xlu0 1
        %1579 = vperm.xlu0 %1578, %v1432
        %v1580 = vpop.permute.xlu0 %1579
        %1582 = vset.pattern.permute.xlu0 1
        %1583 = vperm.xlu0 %1582, %v1433
        %v1584 = vpop.permute.xlu0 %1583
        %1586 = vset.pattern.permute.xlu0 1
        %1587 = vperm.xlu0 %1586, %v1434
        %v1588 = vpop.permute.xlu0 %1587
        %1590 = vset.pattern.permute.xlu0 1
        %1591 = vperm.xlu0 %1590, %v1435
        %v1592 = vpop.permute.xlu0 %1591
        %1594 = vset.pattern.permute.xlu0 1
        %1595 = vperm.xlu0 %1594, %v1436
        %v1596 = vpop.permute.xlu0 %1595
        %1598 = vset.pattern.permute.xlu0 1
        %1599 = vperm.xlu0 %1598, %v1437
        %v1600 = vpop.permute.xlu0 %1599
        %v1602 = vlaneseq
        %v1603 = vshrl.u32 %v1602, 7
        %v1604 = vsub.s32 1, %v1603
        %v1605 = vrot.slane %v1421, %v1604
        %v1606 = vmul.f32 %v1540, %v1605
        %v1607 = vmul.f32 %v1544, %v1605
        %v1608 = vmul.f32 %v1548, %v1605
        %v1609 = vmul.f32 %v1552, %v1605
        %v1610 = vmul.f32 %v1556, %v1605
        %v1611 = vmul.f32 %v1560, %v1605
        %v1612 = vmul.f32 %v1564, %v1605
        %v1613 = vmul.f32 %v1568, %v1605
        %v1614 = vmul.f32 %v1572, %v1605
        %v1615 = vmul.f32 %v1576, %v1605
        %v1616 = vmul.f32 %v1580, %v1605
        %v1617 = vmul.f32 %v1584, %v1605
        %v1618 = vmul.f32 %v1588, %v1605
        %v1619 = vmul.f32 %v1592, %v1605
        %v1620 = vmul.f32 %v1596, %v1605
        %v1621 = vmul.f32 %v1600, %v1605
        %v1622 = vadd.f32 %v1522, %v1606
        %v1623 = vadd.f32 %v1523, %v1607
        %v1624 = vadd.f32 %v1524, %v1608
        %v1625 = vadd.f32 %v1525, %v1609
        %v1626 = vadd.f32 %v1526, %v1610
        %v1627 = vadd.f32 %v1527, %v1611
        %v1628 = vadd.f32 %v1528, %v1612
        %v1629 = vadd.f32 %v1529, %v1613
        %v1630 = vadd.f32 %v1530, %v1614
        %v1631 = vadd.f32 %v1531, %v1615
        %v1632 = vadd.f32 %v1532, %v1616
        %v1633 = vadd.f32 %v1533, %v1617
        %v1634 = vadd.f32 %v1534, %v1618
        %v1635 = vadd.f32 %v1535, %v1619
        %v1636 = vadd.f32 %v1536, %v1620
        %v1637 = vadd.f32 %v1537, %v1621
        %1638 = vset.pattern.permute.xlu0 2
        %1639 = vperm.xlu0 %1638, %v1422
        %v1640 = vpop.permute.xlu0 %1639
        %1642 = vset.pattern.permute.xlu0 2
        %1643 = vperm.xlu0 %1642, %v1423
        %v1644 = vpop.permute.xlu0 %1643
        %1646 = vset.pattern.permute.xlu0 2
        %1647 = vperm.xlu0 %1646, %v1424
        %v1648 = vpop.permute.xlu0 %1647
        %1650 = vset.pattern.permute.xlu0 2
        %1651 = vperm.xlu0 %1650, %v1425
        %v1652 = vpop.permute.xlu0 %1651
        %1654 = vset.pattern.permute.xlu0 2
        %1655 = vperm.xlu0 %1654, %v1426
        %v1656 = vpop.permute.xlu0 %1655
        %1658 = vset.pattern.permute.xlu0 2
        %1659 = vperm.xlu0 %1658, %v1427
        %v1660 = vpop.permute.xlu0 %1659
        %1662 = vset.pattern.permute.xlu0 2
        %1663 = vperm.xlu0 %1662, %v1428
        %v1664 = vpop.permute.xlu0 %1663
        %1666 = vset.pattern.permute.xlu0 2
        %1667 = vperm.xlu0 %1666, %v1429
        %v1668 = vpop.permute.xlu0 %1667
        %1670 = vset.pattern.permute.xlu0 2
        %1671 = vperm.xlu0 %1670, %v1430
        %v1672 = vpop.permute.xlu0 %1671
        %1674 = vset.pattern.permute.xlu0 2
        %1675 = vperm.xlu0 %1674, %v1431
        %v1676 = vpop.permute.xlu0 %1675
        %1678 = vset.pattern.permute.xlu0 2
        %1679 = vperm.xlu0 %1678, %v1432
        %v1680 = vpop.permute.xlu0 %1679
        %1682 = vset.pattern.permute.xlu0 2
        %1683 = vperm.xlu0 %1682, %v1433
        %v1684 = vpop.permute.xlu0 %1683
        %1686 = vset.pattern.permute.xlu0 2
        %1687 = vperm.xlu0 %1686, %v1434
        %v1688 = vpop.permute.xlu0 %1687
        %1690 = vset.pattern.permute.xlu0 2
        %1691 = vperm.xlu0 %1690, %v1435
        %v1692 = vpop.permute.xlu0 %1691
        %1694 = vset.pattern.permute.xlu0 2
        %1695 = vperm.xlu0 %1694, %v1436
        %v1696 = vpop.permute.xlu0 %1695
        %1698 = vset.pattern.permute.xlu0 2
        %1699 = vperm.xlu0 %1698, %v1437
        %v1700 = vpop.permute.xlu0 %1699
        %v1702 = vlaneseq
        %v1703 = vshrl.u32 %v1702, 7
        %v1704 = vsub.s32 2, %v1703
        %v1705 = vrot.slane %v1421, %v1704
        %v1706 = vmul.f32 %v1640, %v1705
        %v1707 = vmul.f32 %v1644, %v1705
        %v1708 = vmul.f32 %v1648, %v1705
        %v1709 = vmul.f32 %v1652, %v1705
        %v1710 = vmul.f32 %v1656, %v1705
        %v1711 = vmul.f32 %v1660, %v1705
        %v1712 = vmul.f32 %v1664, %v1705
        %v1713 = vmul.f32 %v1668, %v1705
        %v1714 = vmul.f32 %v1672, %v1705
        %v1715 = vmul.f32 %v1676, %v1705
        %v1716 = vmul.f32 %v1680, %v1705
        %v1717 = vmul.f32 %v1684, %v1705
        %v1718 = vmul.f32 %v1688, %v1705
        %v1719 = vmul.f32 %v1692, %v1705
        %v1720 = vmul.f32 %v1696, %v1705
        %v1721 = vmul.f32 %v1700, %v1705
        %v1722 = vadd.f32 %v1622, %v1706
        %v1723 = vadd.f32 %v1623, %v1707
        %v1724 = vadd.f32 %v1624, %v1708
        %v1725 = vadd.f32 %v1625, %v1709
        %v1726 = vadd.f32 %v1626, %v1710
        %v1727 = vadd.f32 %v1627, %v1711
        %v1728 = vadd.f32 %v1628, %v1712
        %v1729 = vadd.f32 %v1629, %v1713
        %v1730 = vadd.f32 %v1630, %v1714
        %v1731 = vadd.f32 %v1631, %v1715
        %v1732 = vadd.f32 %v1632, %v1716
        %v1733 = vadd.f32 %v1633, %v1717
        %v1734 = vadd.f32 %v1634, %v1718
        %v1735 = vadd.f32 %v1635, %v1719
        %v1736 = vadd.f32 %v1636, %v1720
        %v1737 = vadd.f32 %v1637, %v1721
        %v1738 = vld [vmem:[#allocation2] sm:$0xff]
        %v1739 = vld [vmem:[#allocation2 + $0x8] sm:$0xff]
        %v1740 = vld [vmem:[#allocation2 + $0x10] sm:$0xff]
        %v1741 = vld [vmem:[#allocation2 + $0x18] sm:$0xff]
        %v1742 = vld [vmem:[#allocation2 + $0x20] sm:$0xff]
        %v1743 = vld [vmem:[#allocation2 + $0x28] sm:$0xff]
        %v1744 = vld [vmem:[#allocation2 + $0x30] sm:$0xff]
        %v1745 = vld [vmem:[#allocation2 + $0x38] sm:$0xff]
        %v1746 = vld [vmem:[#allocation2 + $0x40] sm:$0xff]
        %v1747 = vld [vmem:[#allocation2 + $0x48] sm:$0xff]
        %v1748 = vld [vmem:[#allocation2 + $0x50] sm:$0xff]
        %v1749 = vld [vmem:[#allocation2 + $0x58] sm:$0xff]
        %v1750 = vld [vmem:[#allocation2 + $0x60] sm:$0xff]
        %v1751 = vld [vmem:[#allocation2 + $0x68] sm:$0xff]
        %v1752 = vld [vmem:[#allocation2 + $0x70] sm:$0xff]
        %v1753 = vld [vmem:[#allocation2 + $0x78] sm:$0xff]
        %1755 = vset.pattern.permute.xlu0 0
        %1756 = vperm.xlu0 %1755, %v1738
        %v1757 = vpop.permute.xlu0 %1756
        %1760 = vset.pattern.permute.xlu0 0
        %1761 = vperm.xlu0 %1760, %v1739
        %v1762 = vpop.permute.xlu0 %1761
        %1765 = vset.pattern.permute.xlu0 0
        %1766 = vperm.xlu0 %1765, %v1740
        %v1767 = vpop.permute.xlu0 %1766
        %1770 = vset.pattern.permute.xlu0 0
        %1771 = vperm.xlu0 %1770, %v1741
        %v1772 = vpop.permute.xlu0 %1771
        %1775 = vset.pattern.permute.xlu0 0
        %1776 = vperm.xlu0 %1775, %v1742
        %v1777 = vpop.permute.xlu0 %1776
        %1780 = vset.pattern.permute.xlu0 0
        %1781 = vperm.xlu0 %1780, %v1743
        %v1782 = vpop.permute.xlu0 %1781
        %1785 = vset.pattern.permute.xlu0 0
        %1786 = vperm.xlu0 %1785, %v1744
        %v1787 = vpop.permute.xlu0 %1786
        %1790 = vset.pattern.permute.xlu0 0
        %1791 = vperm.xlu0 %1790, %v1745
        %v1792 = vpop.permute.xlu0 %1791
        %1795 = vset.pattern.permute.xlu0 0
        %1796 = vperm.xlu0 %1795, %v1746
        %v1797 = vpop.permute.xlu0 %1796
        %1800 = vset.pattern.permute.xlu0 0
        %1801 = vperm.xlu0 %1800, %v1747
        %v1802 = vpop.permute.xlu0 %1801
        %1805 = vset.pattern.permute.xlu0 0
        %1806 = vperm.xlu0 %1805, %v1748
        %v1807 = vpop.permute.xlu0 %1806
        %1810 = vset.pattern.permute.xlu0 0
        %1811 = vperm.xlu0 %1810, %v1749
        %v1812 = vpop.permute.xlu0 %1811
        %1815 = vset.pattern.permute.xlu0 0
        %1816 = vperm.xlu0 %1815, %v1750
        %v1817 = vpop.permute.xlu0 %1816
        %1820 = vset.pattern.permute.xlu0 0
        %1821 = vperm.xlu0 %1820, %v1751
        %v1822 = vpop.permute.xlu0 %1821
        %1825 = vset.pattern.permute.xlu0 0
        %1826 = vperm.xlu0 %1825, %v1752
        %v1827 = vpop.permute.xlu0 %1826
        %1830 = vset.pattern.permute.xlu0 0
        %1831 = vperm.xlu0 %1830, %v1753
        %v1832 = vpop.permute.xlu0 %1831
        %v1834 = vadd.f32 %v1722, %v1757
        %v1835 = vadd.f32 %v1723, %v1762
        %v1836 = vadd.f32 %v1724, %v1767
        %v1837 = vadd.f32 %v1725, %v1772
        %v1838 = vadd.f32 %v1726, %v1777
        %v1839 = vadd.f32 %v1727, %v1782
        %v1840 = vadd.f32 %v1728, %v1787
        %v1841 = vadd.f32 %v1729, %v1792
        %v1842 = vadd.f32 %v1730, %v1797
        %v1843 = vadd.f32 %v1731, %v1802
        %v1844 = vadd.f32 %v1732, %v1807
        %v1845 = vadd.f32 %v1733, %v1812
        %v1846 = vadd.f32 %v1734, %v1817
        %v1847 = vadd.f32 %v1735, %v1822
        %v1848 = vadd.f32 %v1736, %v1827
        %v1849 = vadd.f32 %v1737, %v1832
        %v1850 = vmax.f32 %v1834, 0.0
        %v1851 = vmax.f32 %v1835, 0.0
        %v1852 = vmax.f32 %v1836, 0.0
        %v1853 = vmax.f32 %v1837, 0.0
        %v1854 = vmax.f32 %v1838, 0.0
        %v1855 = vmax.f32 %v1839, 0.0
        %v1856 = vmax.f32 %v1840, 0.0
        %v1857 = vmax.f32 %v1841, 0.0
        %v1858 = vmax.f32 %v1842, 0.0
        %v1859 = vmax.f32 %v1843, 0.0
        %v1860 = vmax.f32 %v1844, 0.0
        %v1861 = vmax.f32 %v1845, 0.0
        %v1862 = vmax.f32 %v1846, 0.0
        %v1863 = vmax.f32 %v1847, 0.0
        %v1864 = vmax.f32 %v1848, 0.0
        %v1865 = vmax.f32 %v1849, 0.0
        %v1866 = vld [vmem:[%s8] sm:$0xff]
        %v1867 = vld [vmem:[%s9] sm:$0xff]
        %1869 = vset.pattern.permute.xlu0 0
        %1870 = vperm.xlu0 %1869, %v1867
        %v1871 = vpop.permute.xlu0 %1870
        %1873 = vmatprep.subr.mxu0 0.0
        %1874 = vmatpush1.msra.mxu0 %v1865
        %1875 = vmatprep.subr.mxu0 0.0
        %1876 = vmatpush1.msra.mxu0 %v1864
        %1877 = vmatprep.subr.mxu0 0.0
        %1878 = vmatpush1.msra.mxu0 %v1863
        %1879 = vmatprep.subr.mxu0 0.0
        %1880 = vmatpush1.msra.mxu0 %v1862
        %1881 = vmatprep.subr.mxu0 0.0
        %1882 = vmatpush1.msra.mxu0 %v1861
        %1883 = vmatprep.subr.mxu0 0.0
        %1884 = vmatpush1.msra.mxu0 %v1860
        %1885 = vmatprep.subr.mxu0 0.0
        %1886 = vmatpush1.msra.mxu0 %v1859
        %1887 = vmatprep.subr.mxu0 0.0
        %1888 = vmatpush1.msra.mxu0 %v1858
        %1889 = vmatprep.subr.mxu0 0.0
        %1890 = vmatpush1.msra.mxu0 %v1857
        %1891 = vmatprep.subr.mxu0 0.0
        %1892 = vmatpush1.msra.mxu0 %v1856
        %1893 = vmatprep.subr.mxu0 0.0
        %1894 = vmatpush1.msra.mxu0 %v1855
        %1895 = vmatprep.subr.mxu0 0.0
        %1896 = vmatpush1.msra.mxu0 %v1854
        %1897 = vmatprep.subr.mxu0 0.0
        %1898 = vmatpush1.msra.mxu0 %v1853
        %1899 = vmatprep.subr.mxu0 0.0
        %1900 = vmatpush1.msra.mxu0 %v1852
        %1901 = vmatprep.subr.mxu0 0.0
        %1902 = vmatpush1.msra.mxu0 %v1851
        %1903 = vmatprep.subr.mxu0 0.0
        %1904 = vmatpush1.msra.mxu0 %v1850
        %1905 = vmatprep.subr.mxu0 0.0
        %1906 = vmatpush2.msra.mxu0 0.0
        %1907 = vmatprep.subr.mxu0 0.0
        %1908 = vmatpush2.msra.mxu0 0.0
        %1909 = vmatprep.subr.mxu0 0.0
        %1910 = vmatpush2.msra.mxu0 0.0
        %1911 = vmatprep.subr.mxu0 0.0
        %1912 = vmatpush2.msra.mxu0 0.0
        %1913 = vmatprep.subr.mxu0 0.0
        %1914 = vmatpush2.msra.mxu0 0.0
        %1915 = vmatprep.subr.mxu0 0.0
        %1916 = vmatpush2.msra.mxu0 0.0
        %1917 = vmatprep.subr.mxu0 0.0
        %1918 = vmatpush2.msra.mxu0 0.0
        %1919 = vmatprep.subr.mxu0 0.0
        %1920 = vmatpush2.msra.mxu0 0.0
        %1921 = vmatprep.subr.mxu0 0.0
        %1922 = vmatpush2.msra.mxu0 0.0
        %1923 = vmatprep.subr.mxu0 0.0
        %1924 = vmatpush2.msra.mxu0 0.0
        %1925 = vmatprep.subr.mxu0 0.0
        %1926 = vmatpush2.msra.mxu0 0.0
        %1927 = vmatprep.subr.mxu0 0.0
        %1928 = vmatpush2.msra.mxu0 0.0
        %1929 = vmatprep.subr.mxu0 0.0
        %1930 = vmatpush2.msra.mxu0 0.0
        %1931 = vmatprep.subr.mxu0 0.0
        %1932 = vmatpush2.msra.mxu0 0.0
        %1933 = vmatprep.subr.mxu0 0.0
        %1934 = vmatpush2.msra.mxu0 0.0
        %1935 = vmatprep.subr.mxu0 0.0
        %1936 = vmatpush2.msra.mxu0 0.0
        %1937 = vmatprep.mubr.f32.mxu0 0.0
        %1938 = vmatmul.mubr.f32.gmra.mxu0 %v1866
        %v1939 = vpop.f32.mrf.mxu0
        %v1940 = vadd.f32 %v1871, %v1939
        %v1941 = vpop.f32.mrf.mxu0
        %1942 = vdwg.mxu0
        %v1943 = vld [vmem:[%s594] sm:$0x1]
        %v1944 = vld [vmem:[%s601] sm:$0x7]
        %v1945 = vld [vmem:[%s608] sm:$0x7]
        %v1946 = vld [vmem:[#allocation3] sm:$0x1]
        %v1947 = vsub.f32 %v1940, %v1943
        %v1948 = vand.u32 2147483647, %v1947
        %vm1949 = vcmask 1040384
        %v1950 = vsel %vm1949, %v1948, 0.0
        %1951 = vadd.xlane.f32.xlu0 %v1950
        %v1952 = vpop.xlane.xlu0 %1951
        %v1953 = vrot.slane %v1952, 4
        %v1954 = vadd.f32 %v1952, %v1953
        %v1955 = vrot.slane %v1954, 2
        %v1956 = vadd.f32 %v1954, %v1955
        %v1957 = vrot.slane %v1956, 1
        %v1958 = vadd.f32 %v1956, %v1957
        %s1959 = vtos %v1958
        %v1960 = vstv %s1959
        %v1961 = vadd.f32 %v1946, %v1960
        %vm1962 = vcmask 0
        %1963 = vst.msk [vmem:[#allocation3] sm:$0x1] %vm1962, %v1961
        %v1964 = vld [vmem:[#allocation4] sm:$0x1]
        %v1966 = vrot.slane %v1944, 4
        %v1968 = vsub.f32 %v1940, %v1966
        %v1969 = vand.u32 2147483647, %v1968
        %v1971 = vrot.slane %v1969, 4
        %vm1973 = vcmask 1042432
        %v1974 = vsel %vm1973, %v1971, 0.0
        %1975 = vadd.xlane.f32.xlu0 %v1974
        %v1976 = vpop.xlane.xlu0 %1975
        %v1977 = vrot.slane %v1976, 4
        %v1978 = vadd.f32 %v1976, %v1977
        %v1979 = vrot.slane %v1978, 2
        %v1980 = vadd.f32 %v1978, %v1979
        %v1981 = vrot.slane %v1980, 1
        %v1982 = vadd.f32 %v1980, %v1981
        %s1983 = vtos %v1982
        %v1984 = vstv %s1983
        %v1985 = vadd.f32 %v1964, %v1984
        %1986 = vst.msk [vmem:[#allocation4] sm:$0x1] %vm1962, %v1985
        %v1988 = vrot.slane %v1945, 7
        %v1990 = vmul.f32 %v1940, %v1988
        %v1992 = vrot.slane %v1990, 1
        %v1994 = vsel %vm1973, %v1992, 0.0
        %v1995 = vrot.slane %v1994, 4
        %v1996 = vadd.f32 %v1994, %v1995
        %v1997 = vrot.slane %v1996, 2
        %v1998 = vadd.f32 %v1996, %v1997
        %v1999 = vrot.slane %v1998, 1
        %v2000 = vadd.f32 %v1998, %v1999
        %v2001 = vmul.f32 %v1940, %v1940
        %v2003 = vrot.slane %v2001, 1
        %v2005 = vsel %vm1973, %v2003, 0.0
        %v2006 = vrot.slane %v2005, 4
        %v2007 = vadd.f32 %v2005, %v2006
        %v2008 = vrot.slane %v2007, 2
        %v2009 = vadd.f32 %v2007, %v2008
        %v2010 = vrot.slane %v2009, 1
        %v2011 = vadd.f32 %v2009, %v2010
        %v2012 = vmul.f32 %v1945, %v1945
        %v2013 = vsel %vm1973, %v2012, 0.0
        %v2014 = vrot.slane %v2013, 4
        %v2015 = vadd.f32 %v2013, %v2014
        %v2016 = vrot.slane %v2015, 2
        %v2017 = vadd.f32 %v2015, %v2016
        %v2018 = vrot.slane %v2017, 1
        %v2019 = vadd.f32 %v2017, %v2018
        %v2020 = vmax.f32 %v2011, 1e-16
        %v2021 = vmax.f32 %v2019, 1e-16
        %v2022 = vmul.f32 %v2020, %v2021
        %v2023 = vrsqrt.pop %v2022
        %v2024 = vmul.f32 %v2000, %v2023
        %v2025 = vld [vmem:[#allocation5] sm:$0x1]
        %v2026 = vsub.f32 1.0, %v2024
        %v2027 = vand.u32 2147483647, %v2026
        %v2028 = vsel %vm1949, %v2027, 0.0
        %2029 = vadd.xlane.f32.xlu0 %v2028
        %v2030 = vpop.xlane.xlu0 %2029
        %v2031 = vrot.slane %v2030, 4
        %v2032 = vadd.f32 %v2030, %v2031
        %v2033 = vrot.slane %v2032, 2
        %v2034 = vadd.f32 %v2032, %v2033
        %v2035 = vrot.slane %v2034, 1
        %v2036 = vadd.f32 %v2034, %v2035
        %s2037 = vtos %v2036
        %v2038 = vstv %s2037
        %v2039 = vadd.f32 %v2025, %v2038
        %2040 = vst.msk [vmem:[#allocation5] sm:$0x1] %vm1962, %v2039
        %p2041 = scmp.eq.s32.totalorder %s31, 1
        %p2042 = pnand %p2041, %p610
        %p2043 = pneg %p2042
        // Predicated region
        $region89: #{fused_forward.1} parent=75 // pred_check
          _
        $region90: #{fused_forward.1} parent=75 // pred_check_branch
          %2045 = sbr.rel (%p2042) target = $region92
        $region91: #{fused_forward.1} parent=75 // pred_region
          %v2046 = vld [vmem:[#allocation3] sm:$0x1]
          %v2047 = vmul.f32 %v2046, 0.00390625
          %v2048 = vld [vmem:[#allocation4] sm:$0x1]
          %v2049 = vmul.f32 %v2048, 0.0013020834
          %v2050 = vld [vmem:[#allocation5] sm:$0x1]
          %v2051 = vmul.f32 %v2050, 0.00390625
          %s2052 = sld [smem:[#allocation6]]
          %v2053 = vstv %s2052
          %v2054 = vmul.f32 %v2047, %v2053
          %s2055 = sld [smem:[#allocation6 + $0x1]]
          %v2056 = vstv %s2055
          %v2057 = vmul.f32 %v2049, %v2056
          %v2058 = vadd.f32 %v2054, %v2057
          %s2059 = sld [smem:[#allocation6 + $0x2]]
          %v2060 = vstv %s2059
          %v2061 = vmul.f32 %v2051, %v2060
          %v2062 = vadd.f32 %v2058, %v2061
          %2063 = vst.msk [vmem:[#allocation9] sm:$0x1] %vm1962, %v2062
          %v2065 = vlaneseq
          %v2066 = vshrl.u32 %v2065, 7
          %v2067 = vsub.s32 0, %v2066
          %v2068 = vrot.slane %v2047, %v2067
          %2069 = vrot.lane.b32.xlu0 %v2068, 1
          %v2070 = vpop.permute.xlu0 %2069
          %vm2072 = vcmask 8200
          %2073 = vst.msk [vmem:[#allocation9] sm:$0x1] %vm2072, %v2070
          %v2075 = vlaneseq
          %v2076 = vshrl.u32 %v2075, 7
          %v2077 = vsub.s32 0, %v2076
          %v2078 = vrot.slane %v2049, %v2077
          %2079 = vrot.lane.b32.xlu0 %v2078, 2
          %v2080 = vpop.permute.xlu0 %2079
          %vm2082 = vcmask 16400
          %2083 = vst.msk [vmem:[#allocation9] sm:$0x1] %vm2082, %v2080
          %v2085 = vlaneseq
          %v2086 = vshrl.u32 %v2085, 7
          %v2087 = vsub.s32 0, %v2086
          %v2088 = vrot.slane %v2051, %v2087
          %2089 = vrot.lane.b32.xlu0 %v2088, 3
          %v2090 = vpop.permute.xlu0 %2089
          %vm2092 = vcmask 24600
          %2093 = vst.msk [vmem:[#allocation9] sm:$0x1] %vm2092, %v2090
        $region92: #{fused_forward.1} parent=75 // pred_fallthru
          _
        // Predicated region
        $region93: #{fused_forward.1} parent=75 // pred_check
          %p2094 = pneg %p384
        $region94: #{fused_forward.1} parent=75 // pred_check_branch
          %2096 = sbr.rel (%p2094) target = $region96
        $region95: #{fused_forward.1} parent=75 // pred_region
          %s2098 = ssub.s32 16, 16
          %2099 = vsyncadd [#allocation7], %s2098
          %s2101 = sshll.u32 [#allocation9], 4
          %s2102 = int_to_ptr.vmem [resolvable:$true] %s2101
          %2104 = dma.vmem_to_hbm [thread:$0]  %s2102, 16, %s14, [#allocation7]
        $region96: #{fused_forward.1} parent=75 // pred_fallthru
          _
        // Predicated region
        $region97: #{fused_forward.1} parent=75 // pred_check
          %p2105 = pneg %p384
        $region98: #{fused_forward.1} parent=75 // pred_check_branch
          %2107 = sbr.rel (%p2105) target = $region100
        $region99: #{fused_forward.1} parent=75 // pred_region
          %2108 = dma.done [#allocation7], 16
        $region100: #{fused_forward.1} parent=75 // pred_fallthru
          _
      $region76: #{fused_forward.1} parent=5 // pred_fallthru
        _
      %p2109 = scmp.le.s32.totalorder 2, %s22
      // Predicated region
      $region101: #{fused_forward.1} parent=5 // pred_check
        %p2110 = pneg %p2109
      $region102: #{fused_forward.1} parent=5 // pred_check_branch
        %2112 = sbr.rel (%p2110) target = $region104
      $region103: #{fused_forward.1} parent=5 // pred_region
        %s2113 = ssub.s32 %s22, 2
      $region104: #{fused_forward.1} parent=5 // pred_fallthru
        _
    $region6: #{fused_forward.1} parent=1 // loop_footer
      %s26 = sadd.s32 1, %s22
    $region7: #{fused_forward.1} parent=1 // loop_footer_branch
      %21 = sbr.rel target = $region3
    $region8: #{fused_forward.1} parent=1 // loop_exit
      _
    %2114 = vsyncpa [#allocation7], 1
    %s2115 = scalar_lea.sflag [#allocation7], 1
    %2116 = vsyncpa %s2115, 1
    %2117 = vsyncpa [#allocation8], 1
    %s2118 = scalar_lea.sflag [#allocation8], 1
    %2119 = vsyncpa %s2118, 1

</llo_original>
